<compile_context>
chip_gen: v6e
topology: v6e:2x2x1
jax: 0.10.0
libtpu: 0.0.40
codegen_flags: <defaults>
</compile_context>

<pallas_src>
import jax
import jax.numpy as jnp
from jax.experimental import pallas as pl
from jax.experimental.pallas import tpu as pltpu


def _round_up(a, b):
    return ((a + b - 1) // b) * b


def _pick_tile_h(hidden, target):
    """Largest multiple of 128 <= target that divides hidden (else hidden)."""
    t = min(target, hidden)
    t = (t // 128) * 128
    while t >= 128:
        if hidden % t == 0:
            return t
        t -= 128
    return hidden


def _tpu_defaults():
    """(tile_m, tile_h, vmem_capacity_bytes) tuned per TPU generation."""
    kind = ""
    try:
        kind = (jax.devices()[0].device_kind or "").lower()
    except Exception:
        pass
    vmem_cap = None
    try:
        vmem_cap = int(pltpu.get_tpu_info().vmem_capacity_bytes)
    except Exception:
        vmem_cap = None
    if "v5" in kind:
        tile_m, tile_h = 384, 512            # v5e ridge ~240 fl/B, 128 MiB VMEM
        vmem_cap = vmem_cap or (128 << 20)
    elif "v6" in kind:
        tile_m, tile_h = 768, 512            # v6e ridge ~650 fl/B, 128 MiB VMEM
        vmem_cap = vmem_cap or (128 << 20)
    elif "v7" in kind:
        tile_m, tile_h = 640, 256            # v7x ridge ~620 fl/B, 64 MiB VMEM/TC
        vmem_cap = vmem_cap or (64 << 20)
    else:
        tile_m, tile_h = 512, 256            # unknown: stay conservative
        vmem_cap = vmem_cap or (64 << 20)
    return tile_m, tile_h, vmem_cap


def prepare_ffn_weights(w1_t, w3_t, w2_t, compute_dtype=jnp.bfloat16):
    """One-time weight prep (dtype cast only). Cache the result at weight-load
    time; feed_forward_pallas then streams these arrays directly with zero
    per-call HBM weight copies."""
    def cast(w):
        w = jnp.asarray(w)
        return w if w.dtype == jnp.dtype(compute_dtype) else w.astype(compute_dtype)
    return cast(w1_t), cast(w3_t), cast(w2_t)


def _make_ffn_kernel(gate_chunk, n_chunks, use_acc_scratch):
    def kernel(x_ref, w1_ref, w3_ref, w2_ref, o_ref, *scratch):
        # NOTE: the hidden reduction (k = program_id(1)) MUST stay the trailing
        # "arbitrary" grid axis: the output block index is constant in k, so
        # partial results accumulate into the resident output/accumulator tile.
        acc_ref = scratch[0] if scratch else o_ref
        k = pl.program_id(1)
        x = x_ref[...]

        def chunk(c):
            off = pl.multiple_of(c * gate_chunk, gate_chunk)
            a = jnp.dot(x, w1_ref[:, pl.ds(off, gate_chunk)],
                        preferred_element_type=jnp.float32)
            b = jnp.dot(x, w3_ref[:, pl.ds(off, gate_chunk)],
                        preferred_element_type=jnp.float32)
            h = (a * jax.nn.sigmoid(a)) * b                     # SiLU gate, f32
            return jnp.dot(h.astype(w2_ref.dtype),
                           w2_ref[pl.ds(off, gate_chunk), :],
                           preferred_element_type=jnp.float32)   # (tm, dim)

        if n_chunks == 1:
            part = chunk(0)
        else:
            part = jax.lax.fori_loop(1, n_chunks, lambda c, p: p + chunk(c),
                                     chunk(0), unroll=True)

        @pl.when(k == 0)
        def _():
            acc_ref[...] = part.astype(acc_ref.dtype)   # direct write, no zero-init

        @pl.when(k > 0)
        def _():
            acc_ref[...] += part.astype(acc_ref.dtype)

        if use_acc_scratch:
            @pl.when(k == pl.num_programs(1) - 1)
            def _():
                o_ref[...] = acc_ref[...].astype(o_ref.dtype)

    return kernel


def feed_forward_pallas(x, w1_t, w3_t, w2_t, *, tile_m=None, tile_h=None,
                        compute_dtype=jnp.bfloat16):
    """x: (..., dim). w1_t/w3_t: (dim, hidden). w2_t: (hidden, dim).
    Pass weights through prepare_ffn_weights() once and reuse them."""
    orig_shape = x.shape
    dim = orig_shape[-1]
    hidden = w1_t.shape[1]
    out_dtype = x.dtype

    dflt_tm, dflt_th, vmem_cap = _tpu_defaults()
    tile_m = dflt_tm if tile_m is None else tile_m
    tile_h = dflt_th if tile_h is None else tile_h

    # No-op when the caller cached prepare_ffn_weights(); one-time cost otherwise.
    w1p, w3p, w2p = prepare_ffn_weights(w1_t, w3_t, w2_t, compute_dtype)

    x2d = x.reshape(-1, dim)
    if x2d.dtype != jnp.dtype(compute_dtype):
        x2d = x2d.astype(compute_dtype)
    M = x2d.shape[0]

    bw = jnp.dtype(compute_dtype).itemsize
    bo = jnp.dtype(out_dtype).itemsize
    row_align = max(8, 32 // max(bw, 1))      # 8 (f32) / 16 (bf16) / 32 (int8)

    # Hidden tile divides hidden -> no weight padding, no wasted MXU columns.
    th = _pick_tile_h(hidden, tile_h)
    nh = hidden // th
    gate_chunk = 256 if th % 256 == 0 else (128 if th % 128 == 0 else th)
    n_chunks = th // gate_chunk

    use_acc_scratch = jnp.dtype(out_dtype) != jnp.dtype(jnp.float32)

    # Row tile: packed-sublane aligned; shrink only if VMEM-constrained.
    tm = min(_round_up(tile_m, row_align), _round_up(M, row_align))
    tm = max(tm, row_align)

    def est_vmem(tm_):
        return int(
            2 * (2 * dim * th + th * dim) * bw          # w1, w3, w2 (double-buffered)
            + 2 * tm_ * dim * bw                        # x (double-buffered)
            + 2 * tm_ * dim * bo                        # out (double-buffered)
            + (tm_ * dim * 4 if use_acc_scratch else 0)  # f32 accumulator
            + tm_ * dim * 4                             # f32 partial (loop carry)
            + 3 * tm_ * gate_chunk * 4)                 # a, b, h chunk intermediates

    budget = int(vmem_cap * 0.8)                        # respect physical VMEM (v7x: 64 MiB)
    while est_vmem(tm) > budget and tm > max(256, row_align):
        tm = max(row_align, _round_up(tm // 2, row_align))

    Mp = _round_up(M, tm)
    if Mp != M:
        x2d = jnp.pad(x2d, ((0, Mp - M), (0, 0)))

    vmem_limit = int(min(max(est_vmem(tm) * 5 // 4 + (4 << 20), 32 << 20), budget))

    scratch = [pltpu.VMEM((tm, dim), jnp.float32)] if use_acc_scratch else []
    kernel = _make_ffn_kernel(gate_chunk, n_chunks, use_acc_scratch)

    # TODO(synk): v7x decode (single M tile) leaves one TensorCore idle; split
    # the hidden reduction across the two cores (partial outputs + epilogue add).
    out2d = pl.pallas_call(
        kernel,
        out_shape=jax.ShapeDtypeStruct((Mp, dim), out_dtype),
        grid_spec=pltpu.PrefetchScalarGridSpec(
            num_scalar_prefetch=0,
            grid=(Mp // tm, nh),                               # hidden reduction trails
            in_specs=[
                pl.BlockSpec((tm, dim), lambda i, k: (i, 0)),  # x row tile (resident in k)
                pl.BlockSpec((dim, th), lambda i, k: (0, k)),  # w1 tile
                pl.BlockSpec((dim, th), lambda i, k: (0, k)),  # w3 tile
                pl.BlockSpec((th, dim), lambda i, k: (k, 0)),  # w2 tile
            ],
            out_specs=pl.BlockSpec((tm, dim), lambda i, k: (i, 0)),  # accumulated
            scratch_shapes=scratch,
        ),
        compiler_params=pltpu.CompilerParams(
            dimension_semantics=("parallel", "arbitrary"),
            vmem_limit_bytes=vmem_limit,
        ),
    )(x2d, w1p, w3p, w2p)

    return out2d[:M].reshape(orig_shape)


def compute_hidden_dim(dim, hidden_dim, multiple_of, ffn_dim_multiplier=None):
    hidden_dim = int(2 * hidden_dim / 3)
    if ffn_dim_multiplier is not None:
        hidden_dim = int(ffn_dim_multiplier * hidden_dim)
    hidden_dim = multiple_of * ((hidden_dim + multiple_of - 1) // multiple_of)
    return hidden_dim


def _reference_ffn(x, w1_t, w3_t, w2_t, cdt=jnp.bfloat16):
    # Pure-JAX reference with the same bf16 operand casts the kernel uses.
    xf = x.astype(cdt).astype(jnp.float32)
    w1f = w1_t.astype(cdt).astype(jnp.float32)
    w3f = w3_t.astype(cdt).astype(jnp.float32)
    w2f = w2_t.astype(cdt).astype(jnp.float32)
    a = xf @ w1f
    h = (a * jax.nn.sigmoid(a)) * (xf @ w3f)
    h = h.astype(cdt).astype(jnp.float32)
    return (h @ w2f).astype(x.dtype)


if __name__ == "__main__":
    # Small shapes consistent with ModelArgs: dim=512, multiple_of=256,
    # hidden_dim = 4*dim -> hidden = 1536 after the LLaMA rounding rule.
    batch, seq = 2, 16
    dim, multiple_of = 512, 256
    hidden = compute_hidden_dim(dim, 4 * dim, multiple_of, None)  # -> 1536

    key = jax.random.PRNGKey(0)
    kx, k1, k2, k3 = jax.random.split(key, 4)
    x = jax.random.normal(kx, (batch, seq, dim), dtype=jnp.float32)
    # PyTorch Linear weights are (out, in); store transposed for x @ W.
    w1_t = (jax.random.normal(k1, (hidden, dim), dtype=jnp.float32) * 0.02).T
    w3_t = (jax.random.normal(k3, (hidden, dim), dtype=jnp.float32) * 0.02).T
    w2_t = (jax.random.normal(k2, (dim, hidden), dtype=jnp.float32) * 0.02).T

    # One-time weight prep, hoisted out of the forward path.
    w1p, w3p, w2p = prepare_ffn_weights(w1_t, w3_t, w2_t)

    # f32 output path (accumulates directly into the output block); tile_h=512
    # exercises the in-kernel gate sub-tiling (two 256-wide chunks per step).
    out = feed_forward_pallas(x, w1p, w3p, w2p, tile_h=512)
    out = jax.block_until_ready(out)
    ref = _reference_ffn(x, w1_t, w3_t, w2_t)
    assert jnp.allclose(out, ref, atol=2e-2, rtol=2e-2), "mismatch (f32 out)"

    # bf16 output path (f32 accumulator scratch), multi-tile hidden reduction.
    x_bf = x.astype(jnp.bfloat16)
    out_bf = feed_forward_pallas(x_bf, w1p, w3p, w2p, tile_h=256)
    out_bf = jax.block_until_ready(out_bf)
    ref_bf = _reference_ffn(x_bf, w1_t, w3_t, w2_t)
    assert jnp.allclose(out_bf.astype(jnp.float32), ref_bf.astype(jnp.float32),
                        atol=3e-2, rtol=5e-2), "mismatch (bf16 out)"

    print("KERNEL_OK")
</pallas_src>

<mosaic_0001>
module attributes {stable_mosaic.version = 11 : i64} {
  func.func @kernel(%arg0: i32, %arg1: i32, %arg2: memref<32x512xbf16, #tpu.memory_space<vmem>>, %arg3: memref<512x512xbf16, #tpu.memory_space<vmem>>, %arg4: memref<512x512xbf16, #tpu.memory_space<vmem>>, %arg5: memref<512x512xbf16, #tpu.memory_space<vmem>>, %arg6: memref<32x512xf32, #tpu.memory_space<vmem>>) attributes {dimension_semantics = [#tpu.dimension_semantics<parallel>, #tpu.dimension_semantics<arbitrary>], iteration_bounds = array<i64: 1, 3>, scalar_prefetch = 0 : i64, scratch_operands = 0 : i64, tpu.core_type = #tpu.core_type<tc>, window_params = [{transform_indices = @transform_0, window_bounds = array<i64: 32, 512>}, {transform_indices = @transform_1, window_bounds = array<i64: 512, 512>}, {transform_indices = @transform_2, window_bounds = array<i64: 512, 512>}, {transform_indices = @transform_3, window_bounds = array<i64: 512, 512>}, {transform_indices = @transform_4, window_bounds = array<i64: 32, 512>}]} {
    %c0 = arith.constant 0 : index
    %c0_0 = arith.constant 0 : index
    %0 = vector.load %arg2[%c0, %c0_0] : memref<32x512xbf16, #tpu.memory_space<vmem>>, vector<32x512xbf16>
    %c0_i32 = arith.constant 0 : i32
    %1 = tpu.assume_multiple %c0_i32, 256 : i32
    %c0_1 = arith.constant 0 : index
    %2 = arith.index_cast %1 : i32 to index
    %3 = vector.load %arg3[%c0_1, %2] : memref<512x512xbf16, #tpu.memory_space<vmem>>, vector<512x256xbf16>
    %cst = arith.constant dense<0.000000e+00> : vector<32x256xf32>
    %4 = tpu.matmul %0, %3, %cst {dimension_numbers = #tpu.dot_dimension_numbers<[1], [0], [0], [1], [0, 0, 1, 1], [], []>} : vector<32x512xbf16>, vector<512x256xbf16>, vector<32x256xf32> -> vector<32x256xf32>
    %c0_2 = arith.constant 0 : index
    %5 = arith.index_cast %1 : i32 to index
    %6 = vector.load %arg4[%c0_2, %5] : memref<512x512xbf16, #tpu.memory_space<vmem>>, vector<512x256xbf16>
    %cst_3 = arith.constant dense<0.000000e+00> : vector<32x256xf32>
    %7 = tpu.matmul %0, %6, %cst_3 {dimension_numbers = #tpu.dot_dimension_numbers<[1], [0], [0], [1], [0, 0, 1, 1], [], []>} : vector<32x512xbf16>, vector<512x256xbf16>, vector<32x256xf32> -> vector<32x256xf32>
    %8 = arith.negf %4 : vector<32x256xf32>
    %9 = math.exp %8 : vector<32x256xf32>
    %cst_4 = arith.constant 1.000000e+00 : f32
    %10 = vector.broadcast %cst_4 : f32 to vector<32x256xf32>
    %11 = arith.addf %10, %9 : vector<32x256xf32>
    %12 = arith.divf %10, %11 : vector<32x256xf32>
    %13 = arith.mulf %4, %12 : vector<32x256xf32>
    %14 = arith.mulf %13, %7 : vector<32x256xf32>
    %15 = arith.truncf %14 : vector<32x256xf32> to vector<32x256xbf16>
    %16 = arith.index_cast %1 : i32 to index
    %c0_5 = arith.constant 0 : index
    %17 = vector.load %arg5[%16, %c0_5] : memref<512x512xbf16, #tpu.memory_space<vmem>>, vector<256x512xbf16>
    %cst_6 = arith.constant dense<0.000000e+00> : vector<32x512xf32>
    %18 = tpu.matmul %15, %17, %cst_6 {dimension_numbers = #tpu.dot_dimension_numbers<[1], [0], [0], [1], [0, 0, 1, 1], [], []>} : vector<32x256xbf16>, vector<256x512xbf16>, vector<32x512xf32> -> vector<32x512xf32>
    %c1_i32 = arith.constant 1 : i32
    %c256_i32 = arith.constant 256 : i32
    %19 = arith.muli %c1_i32, %c256_i32 : i32
    %20 = tpu.assume_multiple %19, 256 : i32
    %c0_7 = arith.constant 0 : index
    %21 = arith.index_cast %20 : i32 to index
    %22 = vector.load %arg3[%c0_7, %21] : memref<512x512xbf16, #tpu.memory_space<vmem>>, vector<512x256xbf16>
    %cst_8 = arith.constant dense<0.000000e+00> : vector<32x256xf32>
    %23 = tpu.matmul %0, %22, %cst_8 {dimension_numbers = #tpu.dot_dimension_numbers<[1], [0], [0], [1], [0, 0, 1, 1], [], []>} : vector<32x512xbf16>, vector<512x256xbf16>, vector<32x256xf32> -> vector<32x256xf32>
    %c0_9 = arith.constant 0 : index
    %24 = arith.index_cast %20 : i32 to index
    %25 = vector.load %arg4[%c0_9, %24] : memref<512x512xbf16, #tpu.memory_space<vmem>>, vector<512x256xbf16>
    %cst_10 = arith.constant dense<0.000000e+00> : vector<32x256xf32>
    %26 = tpu.matmul %0, %25, %cst_10 {dimension_numbers = #tpu.dot_dimension_numbers<[1], [0], [0], [1], [0, 0, 1, 1], [], []>} : vector<32x512xbf16>, vector<512x256xbf16>, vector<32x256xf32> -> vector<32x256xf32>
    %27 = arith.negf %23 : vector<32x256xf32>
    %28 = math.exp %27 : vector<32x256xf32>
    %cst_11 = arith.constant 1.000000e+00 : f32
    %29 = vector.broadcast %cst_11 : f32 to vector<32x256xf32>
    %30 = arith.addf %29, %28 : vector<32x256xf32>
    %31 = arith.divf %29, %30 : vector<32x256xf32>
    %32 = arith.mulf %23, %31 : vector<32x256xf32>
    %33 = arith.mulf %32, %26 : vector<32x256xf32>
    %34 = arith.truncf %33 : vector<32x256xf32> to vector<32x256xbf16>
    %35 = arith.index_cast %20 : i32 to index
    %c0_12 = arith.constant 0 : index
    %36 = vector.load %arg5[%35, %c0_12] : memref<512x512xbf16, #tpu.memory_space<vmem>>, vector<256x512xbf16>
    %cst_13 = arith.constant dense<0.000000e+00> : vector<32x512xf32>
    %37 = tpu.matmul %34, %36, %cst_13 {dimension_numbers = #tpu.dot_dimension_numbers<[1], [0], [0], [1], [0, 0, 1, 1], [], []>} : vector<32x256xbf16>, vector<256x512xbf16>, vector<32x512xf32> -> vector<32x512xf32>
    %38 = arith.addf %18, %37 : vector<32x512xf32>
    %c1_i32_14 = arith.constant 1 : i32
    %c0_i32_15 = arith.constant 0 : i32
    %39 = arith.cmpi eq, %arg1, %c0_i32_15 : i32
    %40 = arith.extui %39 : i1 to i32
    %c0_i32_16 = arith.constant 0 : i32
    %41 = arith.cmpi ne, %40, %c0_i32_16 : i32
    scf.if %41 {
      %c0_19 = arith.constant 0 : index
      %c0_20 = arith.constant 0 : index
      %45 = vector.load %arg6[%c0_19, %c0_20] : memref<32x512xf32, #tpu.memory_space<vmem>>, vector<32x512xf32>
      tpu.vector_store %arg6[%c0_19, %c0_20], %38 {strides = array<i32>} : memref<32x512xf32, #tpu.memory_space<vmem>>, vector<32x512xf32>,
    } else {
    }
    %c0_i32_17 = arith.constant 0 : i32
    %42 = arith.cmpi sgt, %arg1, %c0_i32_17 : i32
    %43 = arith.extui %42 : i1 to i32
    %c0_i32_18 = arith.constant 0 : i32
    %44 = arith.cmpi ne, %43, %c0_i32_18 : i32
    scf.if %44 {
      %c0_19 = arith.constant 0 : index
      %c0_20 = arith.constant 0 : index
      %45 = vector.load %arg6[%c0_19, %c0_20] : memref<32x512xf32, #tpu.memory_space<vmem>>, vector<32x512xf32>
      %46 = arith.addf %45, %38 : vector<32x512xf32>
      %c0_21 = arith.constant 0 : index
      %c0_22 = arith.constant 0 : index
      %47 = vector.load %arg6[%c0_21, %c0_22] : memref<32x512xf32, #tpu.memory_space<vmem>>, vector<32x512xf32>
      tpu.vector_store %arg6[%c0_21, %c0_22], %46 {strides = array<i32>} : memref<32x512xf32, #tpu.memory_space<vmem>>, vector<32x512xf32>,
    } else {
    }
    return
  }
  func.func @transform_0(%arg0: i32, %arg1: i32) -> (i32, i32) {
    %c0_i32 = arith.constant 0 : i32
    %c0_i32_0 = arith.constant 0 : i32
    return %arg0, %c0_i32 : i32, i32
  }
  func.func @transform_1(%arg0: i32, %arg1: i32) -> (i32, i32) {
    %c0_i32 = arith.constant 0 : i32
    %c0_i32_0 = arith.constant 0 : i32
    return %c0_i32, %arg1 : i32, i32
  }
  func.func @transform_2(%arg0: i32, %arg1: i32) -> (i32, i32) {
    %c0_i32 = arith.constant 0 : i32
    %c0_i32_0 = arith.constant 0 : i32
    return %c0_i32, %arg1 : i32, i32
  }
  func.func @transform_3(%arg0: i32, %arg1: i32) -> (i32, i32) {
    %c0_i32 = arith.constant 0 : i32
    %c0_i32_0 = arith.constant 0 : i32
    return %arg1, %c0_i32 : i32, i32
  }
  func.func @transform_4(%arg0: i32, %arg1: i32) -> (i32, i32) {
    %c0_i32 = arith.constant 0 : i32
    %c0_i32_0 = arith.constant 0 : i32
    return %arg0, %c0_i32 : i32, i32
  }
}

</mosaic_0001>

<llo_original>
// kernel: tpu_custom_call.1
$region0: #{tpu_custom_call.1}
  #allocation0 [shape = 'u32[]', space=smem, size = 0x4, offset = 0x4, fixed_abs, tag = 'smem constant byte address 0x4 - core index']
  #allocation1 [shape = 'u32[144,128]{1,0:T(1,128)}', space=vmem, size = 0x12000, scoped, tag = 'internal scratch']
  %s0 = inlined_call_operand.hbm [shape: bf16[32,512], index: 0, kind: input, shape index: {}]
  %s1 = inlined_call_operand.hbm [shape: bf16[512,1536], index: 1, kind: input, shape index: {}]
  %s2 = inlined_call_operand.hbm [shape: bf16[512,1536], index: 2, kind: input, shape index: {}]
  %s3 = inlined_call_operand.hbm [shape: bf16[1536,512], index: 3, kind: input, shape index: {}]
  %s4 = inlined_call_operand.hbm [shape: f32[32,512], index: 4, kind: output, shape index: {}]
  %s5 = sld [smem:[#allocation0]]
  $region73: #{tpu_custom_call.1} parent=0
    _
  %s7 = ssub.s32 1, %s5
  %s8 = scalar_select 0, %s7, %s5
  $region1: #{tpu_custom_call.1} parent=0
    #allocation2 [shape = 'u8[32768]{0}', space=vmem, size = 0x8000, scoped, tag = 'input window, operand 0, single buffered']
    #allocation3 [shape = 's32[2]{0}', space=sflag, size = 0x8, scoped, tag = 'scoped memory for tpu_custom_call.1']
    #allocation4 [shape = 's32[2]{0}', space=sflag, size = 0x8, scoped, tag = 'scoped memory for tpu_custom_call.1']
    #allocation5 [shape = 'u8[1048576]{0}', space=vmem, size = 0x100000, scoped, tag = 'input window, operand 1']
    #allocation6 [shape = 's32[2]{0}', space=sflag, size = 0x8, scoped, tag = 'scoped memory for tpu_custom_call.1']
    #allocation7 [shape = 'u8[1048576]{0}', space=vmem, size = 0x100000, scoped, tag = 'input window, operand 2']
    #allocation8 [shape = 'u8[1048576]{0}', space=vmem, size = 0x100000, scoped, tag = 'input window, operand 3']
    #allocation9 [shape = 's32[2]{0}', space=sflag, size = 0x8, scoped, tag = 'scoped memory for tpu_custom_call.1']
    #allocation10 [shape = 'u8[65536]{0}', space=vmem, size = 0x10000, scoped, tag = 'output window, operand 0, single buffered']
    %9 = vsyncpa [#allocation3], 0
    %10 = vsyncpa [#allocation6], 0
    %s11 = scalar_lea.sflag [#allocation6], 1
    %12 = vsyncpa %s11, 0
    %13 = vsyncpa [#allocation9], 0
    %s14 = scalar_lea.sflag [#allocation9], 1
    %15 = vsyncpa %s14, 0
    %16 = vsyncpa [#allocation4], 0
    loop: start=0, step=1, limit=5
    $region2: #{tpu_custom_call.1} parent=1 // loop_pre_header
      _
    $region3: #{tpu_custom_call.1} parent=1 // loop_header
      %s18 = sphi 0, %s22
      %p19 = scmp.ge.s32.totalorder %s18, 5
      %s25 = sphi 0, %s37
      %s26 = sphi 0, %s33
      %s27 = sphi 0, %s25
      %s28 = sphi 0, %s26
      %s29 = sphi 0, %s27
      %s30 = sphi 0, %s28
      %s40 = sphi 0, %s42
      %s43 = sphi 0, %s40
      %s44 = sphi 0, %s43
      %s60 = sphi 0, %s44
      %s66 = sphi 0, %s68
      %s69 = sphi 0, %s66
      %s70 = sphi 0, %s69
      %s86 = sphi 0, %s70
      %s92 = sphi 0, %s94
      %s95 = sphi 0, %s92
      %s96 = sphi 0, %s95
      %s112 = sphi 0, %s96
      %s118 = sphi 0, %s120
      %s121 = sphi 0, %s118
      %s122 = sphi 0, %s121
      %s138 = sphi 0, %s122
      %s144 = sphi 0, %s146
      %s147 = sphi 0, %s144
      %s148 = sphi 0, %s147
      %s164 = sphi 0, %s148
    $region4: #{tpu_custom_call.1} parent=1 // loop_header_branch
      %21 = sbr.rel (%p19) target = $region8
    $region5: #{tpu_custom_call.1} parent=1 // loop_body
      %s23 = ssub.s32 %s18, 1
      %s24 = ssub.s32 %s18, 2
      %s31 = sadd.s32 1, %s26
      %p32 = scmp.ge.s32.totalorder %s31, 3
      %s33 = scalar_select %p32, 0, %s31
      %s34 = sadd.s32 1, %s25
      %s35 = scalar_select %p32, %s34, %s25
      %p36 = scmp.ge.s32.totalorder %s35, 1
      %s37 = scalar_select %p36, 0, %s35
      %s38 = ssub.s32 %s25, %s37
      %p39 = scmp.eq.s32.totalorder %s38, 0
      %s41 = sadd.s32 %s40, 1
      %s42 = scalar_select %p39, %s40, %s41
      %p45 = pneg %p39
      %p46 = scmp.eq.s32.totalorder %s18, 2
      %p47 = por %p45, %p46
      %p48 = scmp.ne.s32.totalorder %s40, %s43
      %p49 = scmp.eq.s32.totalorder %s18, 0
      %p50 = por %p48, %p49
      %p51 = scmp.ne.s32.totalorder %s40, %s43
      %p52 = scmp.eq.s32.totalorder %s23, 2
      %p53 = por %p51, %p52
      %p54 = scmp.ne.s32.totalorder %s43, %s44
      %p55 = scmp.eq.s32.totalorder %s23, 0
      %p56 = por %p54, %p55
      %p57 = scmp.ne.s32.totalorder %s43, %s44
      %p58 = scmp.eq.s32.totalorder %s24, 2
      %p59 = por %p57, %p58
      %p61 = scmp.ne.s32.totalorder %s44, %s60
      %p62 = scmp.eq.s32.totalorder %s24, 0
      %p63 = por %p61, %p62
      %s64 = ssub.s32 %s26, %s33
      %p65 = scmp.eq.s32.totalorder %s64, 0
      %s67 = sadd.s32 %s66, 1
      %s68 = scalar_select %p65, %s66, %s67
      %p71 = pneg %p65
      %p72 = scmp.eq.s32.totalorder %s18, 2
      %p73 = por %p71, %p72
      %p74 = scmp.ne.s32.totalorder %s66, %s69
      %p75 = scmp.eq.s32.totalorder %s18, 0
      %p76 = por %p74, %p75
      %p77 = scmp.ne.s32.totalorder %s66, %s69
      %p78 = scmp.eq.s32.totalorder %s23, 2
      %p79 = por %p77, %p78
      %p80 = scmp.ne.s32.totalorder %s69, %s70
      %p81 = scmp.eq.s32.totalorder %s23, 0
      %p82 = por %p80, %p81
      %p83 = scmp.ne.s32.totalorder %s69, %s70
      %p84 = scmp.eq.s32.totalorder %s24, 2
      %p85 = por %p83, %p84
      %p87 = scmp.ne.s32.totalorder %s70, %s86
      %p88 = scmp.eq.s32.totalorder %s24, 0
      %p89 = por %p87, %p88
      %s90 = ssub.s32 %s26, %s33
      %p91 = scmp.eq.s32.totalorder %s90, 0
      %s93 = sadd.s32 %s92, 1
      %s94 = scalar_select %p91, %s92, %s93
      %p97 = pneg %p91
      %p98 = scmp.eq.s32.totalorder %s18, 2
      %p99 = por %p97, %p98
      %p100 = scmp.ne.s32.totalorder %s92, %s95
      %p101 = scmp.eq.s32.totalorder %s18, 0
      %p102 = por %p100, %p101
      %p103 = scmp.ne.s32.totalorder %s92, %s95
      %p104 = scmp.eq.s32.totalorder %s23, 2
      %p105 = por %p103, %p104
      %p106 = scmp.ne.s32.totalorder %s95, %s96
      %p107 = scmp.eq.s32.totalorder %s23, 0
      %p108 = por %p106, %p107
      %p109 = scmp.ne.s32.totalorder %s95, %s96
      %p110 = scmp.eq.s32.totalorder %s24, 2
      %p111 = por %p109, %p110
      %p113 = scmp.ne.s32.totalorder %s96, %s112
      %p114 = scmp.eq.s32.totalorder %s24, 0
      %p115 = por %p113, %p114
      %s116 = ssub.s32 %s26, %s33
      %p117 = scmp.eq.s32.totalorder %s116, 0
      %s119 = sadd.s32 %s118, 1
      %s120 = scalar_select %p117, %s118, %s119
      %p123 = pneg %p117
      %p124 = scmp.eq.s32.totalorder %s18, 2
      %p125 = por %p123, %p124
      %p126 = scmp.ne.s32.totalorder %s118, %s121
      %p127 = scmp.eq.s32.totalorder %s18, 0
      %p128 = por %p126, %p127
      %p129 = scmp.ne.s32.totalorder %s118, %s121
      %p130 = scmp.eq.s32.totalorder %s23, 2
      %p131 = por %p129, %p130
      %p132 = scmp.ne.s32.totalorder %s121, %s122
      %p133 = scmp.eq.s32.totalorder %s23, 0
      %p134 = por %p132, %p133
      %p135 = scmp.ne.s32.totalorder %s121, %s122
      %p136 = scmp.eq.s32.totalorder %s24, 2
      %p137 = por %p135, %p136
      %p139 = scmp.ne.s32.totalorder %s122, %s138
      %p140 = scmp.eq.s32.totalorder %s24, 0
      %p141 = por %p139, %p140
      %s142 = ssub.s32 %s25, %s37
      %p143 = scmp.eq.s32.totalorder %s142, 0
      %s145 = sadd.s32 %s144, 1
      %s146 = scalar_select %p143, %s144, %s145
      %p149 = pneg %p143
      %p150 = scmp.eq.s32.totalorder %s18, 2
      %p151 = por %p149, %p150
      %p152 = scmp.ne.s32.totalorder %s144, %s147
      %p153 = scmp.eq.s32.totalorder %s18, 0
      %p154 = por %p152, %p153
      %p155 = scmp.ne.s32.totalorder %s144, %s147
      %p156 = scmp.eq.s32.totalorder %s23, 2
      %p157 = por %p155, %p156
      %p158 = scmp.ne.s32.totalorder %s147, %s148
      %p159 = scmp.eq.s32.totalorder %s23, 0
      %p160 = por %p158, %p159
      %p161 = scmp.ne.s32.totalorder %s147, %s148
      %p162 = scmp.eq.s32.totalorder %s24, 2
      %p163 = por %p161, %p162
      %p165 = scmp.ne.s32.totalorder %s148, %s164
      %p166 = scmp.eq.s32.totalorder %s24, 0
      %p167 = por %p165, %p166
      %p168 = scmp.le.s32.totalorder 1, %s18
      %p169 = scmp.lt.s32.totalorder %s18, 4
      %p170 = pnand %p168, %p169
      %p171 = pneg %p170
      // Predicated region
      $region9: #{tpu_custom_call.1} parent=5 // pred_check
        _
      $region10: #{tpu_custom_call.1} parent=5 // pred_check_branch
        %173 = sbr.rel (%p170) target = $region12
      $region11: #{tpu_custom_call.1} parent=5 // pred_region
        %s174 = ssub.s32 %s18, 1
        // Predicated region
        $region13: #{tpu_custom_call.1} parent=11 // pred_check
          %p175 = pneg %p56
        $region14: #{tpu_custom_call.1} parent=11 // pred_check_branch
          %177 = sbr.rel (%p175) target = $region16
        $region15: #{tpu_custom_call.1} parent=11 // pred_region
          %s178 = smul.u32 4, %s27
          %s180 = ssub.s32 1024, 1024
          %181 = vsyncadd [#allocation3], %s180
          %s182 = smul.addr %s178, 4
          %s183 = smul.addr %s182, 64
          %s184 = scalar_lea.hbm %s0, %s183
          %s185 = sshll.u32 [#allocation2], 4
          %s186 = int_to_ptr.vmem [resolvable:$true] %s185
          %191 = dma.hbm_to_vmem [thread:$0]  %s184, 1024, %s186, [#allocation3], 256, 256, 16
        $region16: #{tpu_custom_call.1} parent=11 // pred_fallthru
          _
      $region12: #{tpu_custom_call.1} parent=5 // pred_fallthru
        _
      %p192 = scmp.lt.s32.totalorder %s18, 3
      // Predicated region
      $region17: #{tpu_custom_call.1} parent=5 // pred_check
        %p193 = pneg %p192
      $region18: #{tpu_custom_call.1} parent=5 // pred_check_branch
        %195 = sbr.rel (%p193) target = $region20
      $region19: #{tpu_custom_call.1} parent=5 // pred_region
        // Predicated region
        $region21: #{tpu_custom_call.1} parent=19 // pred_check
          %p196 = pneg %p76
        $region22: #{tpu_custom_call.1} parent=19 // pred_check_branch
          %198 = sbr.rel (%p196) target = $region24
        $region23: #{tpu_custom_call.1} parent=19 // pred_region
          %s199 = sand.u32 %s18, 1
          %s200 = scalar_lea.sflag [#allocation6], %s199
          %s201 = sand.u32 %s66, 1
          %s202 = smul.addr %s201, 1024
          %s203 = scalar_lea.vmem [#allocation5], %s202
          %s204 = smul.u32 4, %s26
          %s206 = ssub.s32 16384, 16384
          %207 = vsyncadd %s200, %s206
          %s208 = smul.addr %s204, 64
          %s209 = scalar_lea.hbm %s1, %s208
          %s210 = sshll.u32 %s203, 4
          %s211 = int_to_ptr.vmem [resolvable:$true] %s210
          %216 = dma.hbm_to_vmem [thread:$0]  %s209, 16384, %s211, %s200, 768, 256, 16
        $region24: #{tpu_custom_call.1} parent=19 // pred_fallthru
          _
        // Predicated region
        $region25: #{tpu_custom_call.1} parent=19 // pred_check
          %p217 = pneg %p102
        $region26: #{tpu_custom_call.1} parent=19 // pred_check_branch
          %219 = sbr.rel (%p217) target = $region28
        $region27: #{tpu_custom_call.1} parent=19 // pred_region
          %s220 = sand.u32 %s18, 1
          %s221 = scalar_lea.sflag [#allocation6], %s220
          %s222 = sand.u32 %s92, 1
          %s223 = smul.addr %s222, 1024
          %s224 = scalar_lea.vmem [#allocation7], %s223
          %s225 = smul.u32 4, %s26
          %s227 = ssub.s32 16384, 16384
          %228 = vsyncadd %s221, %s227
          %s229 = smul.addr %s225, 64
          %s230 = scalar_lea.hbm %s2, %s229
          %s231 = sshll.u32 %s224, 4
          %s232 = int_to_ptr.vmem [resolvable:$true] %s231
          %237 = dma.hbm_to_vmem [thread:$0]  %s230, 16384, %s232, %s221, 768, 256, 16
        $region28: #{tpu_custom_call.1} parent=19 // pred_fallthru
          _
        // Predicated region
        $region29: #{tpu_custom_call.1} parent=19 // pred_check
          %p238 = pneg %p128
        $region30: #{tpu_custom_call.1} parent=19 // pred_check_branch
          %240 = sbr.rel (%p238) target = $region32
        $region31: #{tpu_custom_call.1} parent=19 // pred_region
          %s241 = sand.u32 %s118, 1
          %s242 = scalar_lea.sflag [#allocation9], %s241
          %s243 = sand.u32 %s118, 1
          %s244 = smul.addr %s243, 1024
          %s245 = scalar_lea.vmem [#allocation8], %s244
          %s246 = smul.u32 64, %s26
          %s248 = ssub.s32 16384, 16384
          %249 = vsyncadd %s242, %s248
          %s250 = smul.addr %s246, 4
          %s251 = smul.addr %s250, 64
          %s252 = scalar_lea.hbm %s3, %s251
          %s253 = sshll.u32 %s245, 4
          %s254 = int_to_ptr.vmem [resolvable:$true] %s253
          %259 = dma.hbm_to_vmem [thread:$0]  %s252, 16384, %s254, %s242, 256, 256, 16
        $region32: #{tpu_custom_call.1} parent=19 // pred_fallthru
          _
      $region20: #{tpu_custom_call.1} parent=5 // pred_fallthru
        _
      %p260 = scmp.le.s32.totalorder 1, %s18
      %p261 = scmp.lt.s32.totalorder %s18, 4
      %p262 = pnand %p260, %p261
      %p263 = pneg %p262
      // Predicated region
      $region33: #{tpu_custom_call.1} parent=5 // pred_check
        _
      $region34: #{tpu_custom_call.1} parent=5 // pred_check_branch
        %265 = sbr.rel (%p262) target = $region36
      $region35: #{tpu_custom_call.1} parent=5 // pred_region
        %s266 = ssub.s32 %s18, 1
        // Predicated region
        $region37: #{tpu_custom_call.1} parent=35 // pred_check
          %p267 = pneg %p56
        $region38: #{tpu_custom_call.1} parent=35 // pred_check_branch
          %269 = sbr.rel (%p267) target = $region40
        $region39: #{tpu_custom_call.1} parent=35 // pred_region
          %270 = dma.done [#allocation3], 1024
        $region40: #{tpu_custom_call.1} parent=35 // pred_fallthru
          _
        %s271 = sand.u32 %s23, 1
        %s272 = scalar_lea.sflag [#allocation6], %s271
        %s273 = sand.u32 %s69, 1
        %s274 = smul.addr %s273, 1024
        %s275 = scalar_lea.vmem [#allocation5], %s274
        // Predicated region
        $region41: #{tpu_custom_call.1} parent=35 // pred_check
          %p276 = pneg %p82
        $region42: #{tpu_custom_call.1} parent=35 // pred_check_branch
          %278 = sbr.rel (%p276) target = $region44
        $region43: #{tpu_custom_call.1} parent=35 // pred_region
          %279 = dma.done %s272, 16384
        $region44: #{tpu_custom_call.1} parent=35 // pred_fallthru
          _
        %s280 = sand.u32 %s23, 1
        %s281 = scalar_lea.sflag [#allocation6], %s280
        %s282 = sand.u32 %s95, 1
        %s283 = smul.addr %s282, 1024
        %s284 = scalar_lea.vmem [#allocation7], %s283
        // Predicated region
        $region45: #{tpu_custom_call.1} parent=35 // pred_check
          %p285 = pneg %p108
        $region46: #{tpu_custom_call.1} parent=35 // pred_check_branch
          %287 = sbr.rel (%p285) target = $region48
        $region47: #{tpu_custom_call.1} parent=35 // pred_region
          %288 = dma.done %s281, 16384
        $region48: #{tpu_custom_call.1} parent=35 // pred_fallthru
          _
        %s289 = sand.u32 %s121, 1
        %s290 = scalar_lea.sflag [#allocation9], %s289
        %s291 = sand.u32 %s121, 1
        %s292 = smul.addr %s291, 1024
        %s293 = scalar_lea.vmem [#allocation8], %s292
        // Predicated region
        $region49: #{tpu_custom_call.1} parent=35 // pred_check
          %p294 = pneg %p134
        $region50: #{tpu_custom_call.1} parent=35 // pred_check_branch
          %296 = sbr.rel (%p294) target = $region52
        $region51: #{tpu_custom_call.1} parent=35 // pred_region
          %297 = dma.done %s290, 16384
        $region52: #{tpu_custom_call.1} parent=35 // pred_fallthru
          _
        %p298 = pneg %p56
        %p299 = pneg %p53
        %s300 = sand.u32 %s23, 1
        %s301 = scalar_lea.sflag [#allocation6], %s300
        %s302 = sand.u32 %s69, 1
        %s303 = smul.addr %s302, 1024
        %s304 = scalar_lea.vmem [#allocation5], %s303
        %p305 = pneg %p82
        %p306 = pneg %p79
        %s307 = sand.u32 %s23, 1
        %s308 = scalar_lea.sflag [#allocation6], %s307
        %s309 = sand.u32 %s95, 1
        %s310 = smul.addr %s309, 1024
        %s311 = scalar_lea.vmem [#allocation7], %s310
        %p312 = pneg %p108
        %p313 = pneg %p105
        %s314 = sand.u32 %s121, 1
        %s315 = scalar_lea.sflag [#allocation9], %s314
        %s316 = sand.u32 %s121, 1
        %s317 = smul.addr %s316, 1024
        %s318 = scalar_lea.vmem [#allocation8], %s317
        %p319 = pneg %p134
        %p320 = pneg %p131
        %p321 = pneg %p160
        %p322 = pneg %p157
        %s323 = smul.u32 4, %s27
        %s324 = smul.u32 4, %s28
        %s325 = smul.u32 4, %s28
        %s326 = smul.u32 64, %s28
        %s327 = smul.u32 4, %s27
        %v328 = vld [vmem:[#allocation2] sm:$0xff]
        %v329 = vld [vmem:[#allocation2 + $0x8] sm:$0xff]
        %v330 = vld [vmem:[#allocation2 + $0x10] sm:$0xff]
        %v331 = vld [vmem:[#allocation2 + $0x18] sm:$0xff]
        %v332 = vld [vmem:[#allocation2 + $0x20] sm:$0xff]
        %v333 = vld [vmem:[#allocation2 + $0x28] sm:$0xff]
        %v334 = vld [vmem:[#allocation2 + $0x30] sm:$0xff]
        %v335 = vld [vmem:[#allocation2 + $0x38] sm:$0xff]
        %v336 = vld [vmem:[%s275] sm:$0xff]
        %v337 = vld [vmem:[%s275 + $0x10] sm:$0xff]
        %v338 = vld [vmem:[%s275 + $0x20] sm:$0xff]
        %v339 = vld [vmem:[%s275 + $0x30] sm:$0xff]
        %v340 = vld [vmem:[%s275 + $0x40] sm:$0xff]
        %v341 = vld [vmem:[%s275 + $0x50] sm:$0xff]
        %v342 = vld [vmem:[%s275 + $0x60] sm:$0xff]
        %v343 = vld [vmem:[%s275 + $0x70] sm:$0xff]
        %v344 = vld [vmem:[%s275 + $0x80] sm:$0xff]
        %v345 = vld [vmem:[%s275 + $0x90] sm:$0xff]
        %v346 = vld [vmem:[%s275 + $0xa0] sm:$0xff]
        %v347 = vld [vmem:[%s275 + $0xb0] sm:$0xff]
        %v348 = vld [vmem:[%s275 + $0xc0] sm:$0xff]
        %v349 = vld [vmem:[%s275 + $0xd0] sm:$0xff]
        %v350 = vld [vmem:[%s275 + $0xe0] sm:$0xff]
        %v351 = vld [vmem:[%s275 + $0xf0] sm:$0xff]
        %v352 = vld [vmem:[%s275 + $0x100] sm:$0xff]
        %v353 = vld [vmem:[%s275 + $0x110] sm:$0xff]
        %v354 = vld [vmem:[%s275 + $0x120] sm:$0xff]
        %v355 = vld [vmem:[%s275 + $0x130] sm:$0xff]
        %v356 = vld [vmem:[%s275 + $0x140] sm:$0xff]
        %v357 = vld [vmem:[%s275 + $0x150] sm:$0xff]
        %v358 = vld [vmem:[%s275 + $0x160] sm:$0xff]
        %v359 = vld [vmem:[%s275 + $0x170] sm:$0xff]
        %v360 = vld [vmem:[%s275 + $0x180] sm:$0xff]
        %v361 = vld [vmem:[%s275 + $0x190] sm:$0xff]
        %v362 = vld [vmem:[%s275 + $0x1a0] sm:$0xff]
        %v363 = vld [vmem:[%s275 + $0x1b0] sm:$0xff]
        %v364 = vld [vmem:[%s275 + $0x1c0] sm:$0xff]
        %v365 = vld [vmem:[%s275 + $0x1d0] sm:$0xff]
        %v366 = vld [vmem:[%s275 + $0x1e0] sm:$0xff]
        %v367 = vld [vmem:[%s275 + $0x1f0] sm:$0xff]
        %v368 = vld [vmem:[%s275 + $0x200] sm:$0xff]
        %v369 = vld [vmem:[%s275 + $0x210] sm:$0xff]
        %v370 = vld [vmem:[%s275 + $0x220] sm:$0xff]
        %v371 = vld [vmem:[%s275 + $0x230] sm:$0xff]
        %v372 = vld [vmem:[%s275 + $0x240] sm:$0xff]
        %v373 = vld [vmem:[%s275 + $0x250] sm:$0xff]
        %v374 = vld [vmem:[%s275 + $0x260] sm:$0xff]
        %v375 = vld [vmem:[%s275 + $0x270] sm:$0xff]
        %v376 = vld [vmem:[%s275 + $0x280] sm:$0xff]
        %v377 = vld [vmem:[%s275 + $0x290] sm:$0xff]
        %v378 = vld [vmem:[%s275 + $0x2a0] sm:$0xff]
        %v379 = vld [vmem:[%s275 + $0x2b0] sm:$0xff]
        %v380 = vld [vmem:[%s275 + $0x2c0] sm:$0xff]
        %v381 = vld [vmem:[%s275 + $0x2d0] sm:$0xff]
        %v382 = vld [vmem:[%s275 + $0x2e0] sm:$0xff]
        %v383 = vld [vmem:[%s275 + $0x2f0] sm:$0xff]
        %v384 = vld [vmem:[%s275 + $0x300] sm:$0xff]
        %v385 = vld [vmem:[%s275 + $0x310] sm:$0xff]
        %v386 = vld [vmem:[%s275 + $0x320] sm:$0xff]
        %v387 = vld [vmem:[%s275 + $0x330] sm:$0xff]
        %v388 = vld [vmem:[%s275 + $0x340] sm:$0xff]
        %v389 = vld [vmem:[%s275 + $0x350] sm:$0xff]
        %v390 = vld [vmem:[%s275 + $0x360] sm:$0xff]
        %v391 = vld [vmem:[%s275 + $0x370] sm:$0xff]
        %v392 = vld [vmem:[%s275 + $0x380] sm:$0xff]
        %v393 = vld [vmem:[%s275 + $0x390] sm:$0xff]
        %v394 = vld [vmem:[%s275 + $0x3a0] sm:$0xff]
        %v395 = vld [vmem:[%s275 + $0x3b0] sm:$0xff]
        %v396 = vld [vmem:[%s275 + $0x3c0] sm:$0xff]
        %v397 = vld [vmem:[%s275 + $0x3d0] sm:$0xff]
        %v398 = vld [vmem:[%s275 + $0x3e0] sm:$0xff]
        %v399 = vld [vmem:[%s275 + $0x3f0] sm:$0xff]
        %v408 = vunpack.c.l.b16 %v328
        %v409 = vunpack.c.h.b16 %v328
        %v410 = vunpack.c.l.b16 %v329
        %v411 = vunpack.c.h.b16 %v329
        %v412 = vunpack.c.l.b16 %v330
        %v413 = vunpack.c.h.b16 %v330
        %v414 = vunpack.c.l.b16 %v331
        %v415 = vunpack.c.h.b16 %v331
        %v416 = vunpack.c.l.b16 %v332
        %v417 = vunpack.c.h.b16 %v332
        %v418 = vunpack.c.l.b16 %v333
        %v419 = vunpack.c.h.b16 %v333
        %v420 = vunpack.c.l.b16 %v334
        %v421 = vunpack.c.h.b16 %v334
        %v422 = vunpack.c.l.b16 %v335
        %v423 = vunpack.c.h.b16 %v335
        %v424 = vpack.c.b16 %v412, %v408
        %v425 = vpack.c.b16 %v413, %v409
        %v426 = vpack.c.b16 %v414, %v410
        %v427 = vpack.c.b16 %v415, %v411
        %v428 = vpack.c.b16 %v420, %v416
        %v429 = vpack.c.b16 %v421, %v417
        %v430 = vpack.c.b16 %v422, %v418
        %v431 = vpack.c.b16 %v423, %v419
        %v504 = vunpack.c.l.b16 %v336
        %v505 = vunpack.c.h.b16 %v336
        %v506 = vunpack.c.l.b16 %v337
        %v507 = vunpack.c.h.b16 %v337
        %v508 = vunpack.c.l.b16 %v338
        %v509 = vunpack.c.h.b16 %v338
        %v510 = vunpack.c.l.b16 %v339
        %v511 = vunpack.c.h.b16 %v339
        %v512 = vunpack.c.l.b16 %v340
        %v513 = vunpack.c.h.b16 %v340
        %v514 = vunpack.c.l.b16 %v341
        %v515 = vunpack.c.h.b16 %v341
        %v516 = vunpack.c.l.b16 %v342
        %v517 = vunpack.c.h.b16 %v342
        %v518 = vunpack.c.l.b16 %v343
        %v519 = vunpack.c.h.b16 %v343
        %v520 = vunpack.c.l.b16 %v344
        %v521 = vunpack.c.h.b16 %v344
        %v522 = vunpack.c.l.b16 %v345
        %v523 = vunpack.c.h.b16 %v345
        %v524 = vunpack.c.l.b16 %v346
        %v525 = vunpack.c.h.b16 %v346
        %v526 = vunpack.c.l.b16 %v347
        %v527 = vunpack.c.h.b16 %v347
        %v528 = vunpack.c.l.b16 %v348
        %v529 = vunpack.c.h.b16 %v348
        %v530 = vunpack.c.l.b16 %v349
        %v531 = vunpack.c.h.b16 %v349
        %v532 = vunpack.c.l.b16 %v350
        %v533 = vunpack.c.h.b16 %v350
        %v534 = vunpack.c.l.b16 %v351
        %v535 = vunpack.c.h.b16 %v351
        %v536 = vunpack.c.l.b16 %v352
        %v537 = vunpack.c.h.b16 %v352
        %v538 = vunpack.c.l.b16 %v353
        %v539 = vunpack.c.h.b16 %v353
        %v540 = vunpack.c.l.b16 %v354
        %v541 = vunpack.c.h.b16 %v354
        %v542 = vunpack.c.l.b16 %v355
        %v543 = vunpack.c.h.b16 %v355
        %v544 = vunpack.c.l.b16 %v356
        %v545 = vunpack.c.h.b16 %v356
        %v546 = vunpack.c.l.b16 %v357
        %v547 = vunpack.c.h.b16 %v357
        %v548 = vunpack.c.l.b16 %v358
        %v549 = vunpack.c.h.b16 %v358
        %v550 = vunpack.c.l.b16 %v359
        %v551 = vunpack.c.h.b16 %v359
        %v552 = vunpack.c.l.b16 %v360
        %v553 = vunpack.c.h.b16 %v360
        %v554 = vunpack.c.l.b16 %v361
        %v555 = vunpack.c.h.b16 %v361
        %v556 = vunpack.c.l.b16 %v362
        %v557 = vunpack.c.h.b16 %v362
        %v558 = vunpack.c.l.b16 %v363
        %v559 = vunpack.c.h.b16 %v363
        %v560 = vunpack.c.l.b16 %v364
        %v561 = vunpack.c.h.b16 %v364
        %v562 = vunpack.c.l.b16 %v365
        %v563 = vunpack.c.h.b16 %v365
        %v564 = vunpack.c.l.b16 %v366
        %v565 = vunpack.c.h.b16 %v366
        %v566 = vunpack.c.l.b16 %v367
        %v567 = vunpack.c.h.b16 %v367
        %v568 = vunpack.c.l.b16 %v368
        %v569 = vunpack.c.h.b16 %v368
        %v570 = vunpack.c.l.b16 %v369
        %v571 = vunpack.c.h.b16 %v369
        %v572 = vunpack.c.l.b16 %v370
        %v573 = vunpack.c.h.b16 %v370
        %v574 = vunpack.c.l.b16 %v371
        %v575 = vunpack.c.h.b16 %v371
        %v576 = vunpack.c.l.b16 %v372
        %v577 = vunpack.c.h.b16 %v372
        %v578 = vunpack.c.l.b16 %v373
        %v579 = vunpack.c.h.b16 %v373
        %v580 = vunpack.c.l.b16 %v374
        %v581 = vunpack.c.h.b16 %v374
        %v582 = vunpack.c.l.b16 %v375
        %v583 = vunpack.c.h.b16 %v375
        %v584 = vunpack.c.l.b16 %v376
        %v585 = vunpack.c.h.b16 %v376
        %v586 = vunpack.c.l.b16 %v377
        %v587 = vunpack.c.h.b16 %v377
        %v588 = vunpack.c.l.b16 %v378
        %v589 = vunpack.c.h.b16 %v378
        %v590 = vunpack.c.l.b16 %v379
        %v591 = vunpack.c.h.b16 %v379
        %v592 = vunpack.c.l.b16 %v380
        %v593 = vunpack.c.h.b16 %v380
        %v594 = vunpack.c.l.b16 %v381
        %v595 = vunpack.c.h.b16 %v381
        %v596 = vunpack.c.l.b16 %v382
        %v597 = vunpack.c.h.b16 %v382
        %v598 = vunpack.c.l.b16 %v383
        %v599 = vunpack.c.h.b16 %v383
        %v600 = vunpack.c.l.b16 %v384
        %v601 = vunpack.c.h.b16 %v384
        %v602 = vunpack.c.l.b16 %v385
        %v603 = vunpack.c.h.b16 %v385
        %v604 = vunpack.c.l.b16 %v386
        %v605 = vunpack.c.h.b16 %v386
        %v606 = vunpack.c.l.b16 %v387
        %v607 = vunpack.c.h.b16 %v387
        %v608 = vunpack.c.l.b16 %v388
        %v609 = vunpack.c.h.b16 %v388
        %v610 = vunpack.c.l.b16 %v389
        %v611 = vunpack.c.h.b16 %v389
        %v612 = vunpack.c.l.b16 %v390
        %v613 = vunpack.c.h.b16 %v390
        %v614 = vunpack.c.l.b16 %v391
        %v615 = vunpack.c.h.b16 %v391
        %v616 = vunpack.c.l.b16 %v392
        %v617 = vunpack.c.h.b16 %v392
        %v618 = vunpack.c.l.b16 %v393
        %v619 = vunpack.c.h.b16 %v393
        %v620 = vunpack.c.l.b16 %v394
        %v621 = vunpack.c.h.b16 %v394
        %v622 = vunpack.c.l.b16 %v395
        %v623 = vunpack.c.h.b16 %v395
        %v624 = vunpack.c.l.b16 %v396
        %v625 = vunpack.c.h.b16 %v396
        %v626 = vunpack.c.l.b16 %v397
        %v627 = vunpack.c.h.b16 %v397
        %v628 = vunpack.c.l.b16 %v398
        %v629 = vunpack.c.h.b16 %v398
        %v630 = vunpack.c.l.b16 %v399
        %v631 = vunpack.c.h.b16 %v399
        %v632 = vpack.c.b16 %v506, %v504
        %v633 = vpack.c.b16 %v507, %v505
        %v634 = vpack.c.b16 %v510, %v508
        %v635 = vpack.c.b16 %v511, %v509
        %v636 = vpack.c.b16 %v514, %v512
        %v637 = vpack.c.b16 %v515, %v513
        %v638 = vpack.c.b16 %v518, %v516
        %v639 = vpack.c.b16 %v519, %v517
        %v640 = vpack.c.b16 %v522, %v520
        %v641 = vpack.c.b16 %v523, %v521
        %v642 = vpack.c.b16 %v526, %v524
        %v643 = vpack.c.b16 %v527, %v525
        %v644 = vpack.c.b16 %v530, %v528
        %v645 = vpack.c.b16 %v531, %v529
        %v646 = vpack.c.b16 %v534, %v532
        %v647 = vpack.c.b16 %v535, %v533
        %v648 = vpack.c.b16 %v538, %v536
        %v649 = vpack.c.b16 %v539, %v537
        %v650 = vpack.c.b16 %v542, %v540
        %v651 = vpack.c.b16 %v543, %v541
        %v652 = vpack.c.b16 %v546, %v544
        %v653 = vpack.c.b16 %v547, %v545
        %v654 = vpack.c.b16 %v550, %v548
        %v655 = vpack.c.b16 %v551, %v549
        %v656 = vpack.c.b16 %v554, %v552
        %v657 = vpack.c.b16 %v555, %v553
        %v658 = vpack.c.b16 %v558, %v556
        %v659 = vpack.c.b16 %v559, %v557
        %v660 = vpack.c.b16 %v562, %v560
        %v661 = vpack.c.b16 %v563, %v561
        %v662 = vpack.c.b16 %v566, %v564
        %v663 = vpack.c.b16 %v567, %v565
        %v664 = vpack.c.b16 %v570, %v568
        %v665 = vpack.c.b16 %v571, %v569
        %v666 = vpack.c.b16 %v574, %v572
        %v667 = vpack.c.b16 %v575, %v573
        %v668 = vpack.c.b16 %v578, %v576
        %v669 = vpack.c.b16 %v579, %v577
        %v670 = vpack.c.b16 %v582, %v580
        %v671 = vpack.c.b16 %v583, %v581
        %v672 = vpack.c.b16 %v586, %v584
        %v673 = vpack.c.b16 %v587, %v585
        %v674 = vpack.c.b16 %v590, %v588
        %v675 = vpack.c.b16 %v591, %v589
        %v676 = vpack.c.b16 %v594, %v592
        %v677 = vpack.c.b16 %v595, %v593
        %v678 = vpack.c.b16 %v598, %v596
        %v679 = vpack.c.b16 %v599, %v597
        %v680 = vpack.c.b16 %v602, %v600
        %v681 = vpack.c.b16 %v603, %v601
        %v682 = vpack.c.b16 %v606, %v604
        %v683 = vpack.c.b16 %v607, %v605
        %v684 = vpack.c.b16 %v610, %v608
        %v685 = vpack.c.b16 %v611, %v609
        %v686 = vpack.c.b16 %v614, %v612
        %v687 = vpack.c.b16 %v615, %v613
        %v688 = vpack.c.b16 %v618, %v616
        %v689 = vpack.c.b16 %v619, %v617
        %v690 = vpack.c.b16 %v622, %v620
        %v691 = vpack.c.b16 %v623, %v621
        %v692 = vpack.c.b16 %v626, %v624
        %v693 = vpack.c.b16 %v627, %v625
        %v694 = vpack.c.b16 %v630, %v628
        %v695 = vpack.c.b16 %v631, %v629
        %760 = vmatprep.subr.bf16.mxu0 %v647
        %761 = vmatpush1.bf16.msra.mxu0 %v646
        %762 = vmatprep.subr.bf16.mxu0 %v645
        %763 = vmatpush1.bf16.msra.mxu0 %v644
        %764 = vmatprep.subr.bf16.mxu0 %v643
        %765 = vmatpush1.bf16.msra.mxu0 %v642
        %766 = vmatprep.subr.bf16.mxu0 %v641
        %767 = vmatpush1.bf16.msra.mxu0 %v640
        %768 = vmatprep.subr.bf16.mxu0 %v639
        %769 = vmatpush1.bf16.msra.mxu0 %v638
        %770 = vmatprep.subr.bf16.mxu0 %v637
        %771 = vmatpush1.bf16.msra.mxu0 %v636
        %772 = vmatprep.subr.bf16.mxu0 %v635
        %773 = vmatpush1.bf16.msra.mxu0 %v634
        %774 = vmatprep.subr.bf16.mxu0 %v633
        %775 = vmatpush1.bf16.msra.mxu0 %v632
        %776 = vmatprep.subr.bf16.mxu0 %v663
        %777 = vmatpush2.bf16.msra.mxu0 %v662
        %778 = vmatprep.subr.bf16.mxu0 %v661
        %779 = vmatpush2.bf16.msra.mxu0 %v660
        %780 = vmatprep.subr.bf16.mxu0 %v659
        %781 = vmatpush2.bf16.msra.mxu0 %v658
        %782 = vmatprep.subr.bf16.mxu0 %v657
        %783 = vmatpush2.bf16.msra.mxu0 %v656
        %784 = vmatprep.subr.bf16.mxu0 %v655
        %785 = vmatpush2.bf16.msra.mxu0 %v654
        %786 = vmatprep.subr.bf16.mxu0 %v653
        %787 = vmatpush2.bf16.msra.mxu0 %v652
        %788 = vmatprep.subr.bf16.mxu0 %v651
        %789 = vmatpush2.bf16.msra.mxu0 %v650
        %790 = vmatprep.subr.bf16.mxu0 %v649
        %791 = vmatpush2.bf16.msra.mxu0 %v648
        %792 = vmatprep.mubr.bf16.mxu0 %v425
        %793 = vmatmul.mubr.bf16.gmra.mxu0 %v424
        %v794 = vpop.f32.mrf.mxu0
        %v795 = vadd.f32 0.0, %v794
        %v796 = vpop.f32.mrf.mxu0
        %v797 = vadd.f32 0.0, %v796
        %v798 = vpop.f32.mrf.mxu0
        %v799 = vadd.f32 0.0, %v798
        %v800 = vpop.f32.mrf.mxu0
        %v801 = vadd.f32 0.0, %v800
        %802 = vmatprep.mubr.bf16.mxu0 %v429
        %803 = vmatmul.mubr.bf16.gmra.mxu0 %v428
        %v804 = vpop.f32.mrf.mxu0
        %v805 = vadd.f32 0.0, %v804
        %v806 = vpop.f32.mrf.mxu0
        %v807 = vadd.f32 0.0, %v806
        %v808 = vpop.f32.mrf.mxu0
        %v809 = vadd.f32 0.0, %v808
        %v810 = vpop.f32.mrf.mxu0
        %v811 = vadd.f32 0.0, %v810
        %812 = vdwg.mxu0
        %813 = vmatprep.subr.bf16.mxu0 %v679
        %814 = vmatpush1.bf16.msra.mxu0 %v678
        %815 = vmatprep.subr.bf16.mxu0 %v677
        %816 = vmatpush1.bf16.msra.mxu0 %v676
        %817 = vmatprep.subr.bf16.mxu0 %v675
        %818 = vmatpush1.bf16.msra.mxu0 %v674
        %819 = vmatprep.subr.bf16.mxu0 %v673
        %820 = vmatpush1.bf16.msra.mxu0 %v672
        %821 = vmatprep.subr.bf16.mxu0 %v671
        %822 = vmatpush1.bf16.msra.mxu0 %v670
        %823 = vmatprep.subr.bf16.mxu0 %v669
        %824 = vmatpush1.bf16.msra.mxu0 %v668
        %825 = vmatprep.subr.bf16.mxu0 %v667
        %826 = vmatpush1.bf16.msra.mxu0 %v666
        %827 = vmatprep.subr.bf16.mxu0 %v665
        %828 = vmatpush1.bf16.msra.mxu0 %v664
        %829 = vmatprep.subr.bf16.mxu0 %v695
        %830 = vmatpush2.bf16.msra.mxu0 %v694
        %831 = vmatprep.subr.bf16.mxu0 %v693
        %832 = vmatpush2.bf16.msra.mxu0 %v692
        %833 = vmatprep.subr.bf16.mxu0 %v691
        %834 = vmatpush2.bf16.msra.mxu0 %v690
        %835 = vmatprep.subr.bf16.mxu0 %v689
        %836 = vmatpush2.bf16.msra.mxu0 %v688
        %837 = vmatprep.subr.bf16.mxu0 %v687
        %838 = vmatpush2.bf16.msra.mxu0 %v686
        %839 = vmatprep.subr.bf16.mxu0 %v685
        %840 = vmatpush2.bf16.msra.mxu0 %v684
        %841 = vmatprep.subr.bf16.mxu0 %v683
        %842 = vmatpush2.bf16.msra.mxu0 %v682
        %843 = vmatprep.subr.bf16.mxu0 %v681
        %844 = vmatpush2.bf16.msra.mxu0 %v680
        %845 = vmatprep.mubr.bf16.mxu0 %v427
        %846 = vmatmul.mubr.bf16.gmra.mxu0 %v426
        %v847 = vpop.f32.mrf.mxu0
        %v848 = vadd.f32 %v795, %v847
        %v849 = vpop.f32.mrf.mxu0
        %v850 = vadd.f32 %v797, %v849
        %v851 = vpop.f32.mrf.mxu0
        %v852 = vadd.f32 %v799, %v851
        %v853 = vpop.f32.mrf.mxu0
        %v854 = vadd.f32 %v801, %v853
        %855 = vmatprep.mubr.bf16.mxu0 %v431
        %856 = vmatmul.mubr.bf16.gmra.mxu0 %v430
        %v857 = vpop.f32.mrf.mxu0
        %v858 = vadd.f32 %v805, %v857
        %v859 = vpop.f32.mrf.mxu0
        %v860 = vadd.f32 %v807, %v859
        %v861 = vpop.f32.mrf.mxu0
        %v862 = vadd.f32 %v809, %v861
        %v863 = vpop.f32.mrf.mxu0
        %v864 = vadd.f32 %v811, %v863
        %865 = vdwg.mxu0
        %v866 = vld [vmem:[%s284] sm:$0xff]
        %v867 = vld [vmem:[%s284 + $0x10] sm:$0xff]
        %v868 = vld [vmem:[%s284 + $0x20] sm:$0xff]
        %v869 = vld [vmem:[%s284 + $0x30] sm:$0xff]
        %v870 = vld [vmem:[%s284 + $0x40] sm:$0xff]
        %v871 = vld [vmem:[%s284 + $0x50] sm:$0xff]
        %v872 = vld [vmem:[%s284 + $0x60] sm:$0xff]
        %v873 = vld [vmem:[%s284 + $0x70] sm:$0xff]
        %v874 = vld [vmem:[%s284 + $0x80] sm:$0xff]
        %v875 = vld [vmem:[%s284 + $0x90] sm:$0xff]
        %v876 = vld [vmem:[%s284 + $0xa0] sm:$0xff]
        %v877 = vld [vmem:[%s284 + $0xb0] sm:$0xff]
        %v878 = vld [vmem:[%s284 + $0xc0] sm:$0xff]
        %v879 = vld [vmem:[%s284 + $0xd0] sm:$0xff]
        %v880 = vld [vmem:[%s284 + $0xe0] sm:$0xff]
        %v881 = vld [vmem:[%s284 + $0xf0] sm:$0xff]
        %v882 = vld [vmem:[%s284 + $0x100] sm:$0xff]
        %v883 = vld [vmem:[%s284 + $0x110] sm:$0xff]
        %v884 = vld [vmem:[%s284 + $0x120] sm:$0xff]
        %v885 = vld [vmem:[%s284 + $0x130] sm:$0xff]
        %v886 = vld [vmem:[%s284 + $0x140] sm:$0xff]
        %v887 = vld [vmem:[%s284 + $0x150] sm:$0xff]
        %v888 = vld [vmem:[%s284 + $0x160] sm:$0xff]
        %v889 = vld [vmem:[%s284 + $0x170] sm:$0xff]
        %v890 = vld [vmem:[%s284 + $0x180] sm:$0xff]
        %v891 = vld [vmem:[%s284 + $0x190] sm:$0xff]
        %v892 = vld [vmem:[%s284 + $0x1a0] sm:$0xff]
        %v893 = vld [vmem:[%s284 + $0x1b0] sm:$0xff]
        %v894 = vld [vmem:[%s284 + $0x1c0] sm:$0xff]
        %v895 = vld [vmem:[%s284 + $0x1d0] sm:$0xff]
        %v896 = vld [vmem:[%s284 + $0x1e0] sm:$0xff]
        %v897 = vld [vmem:[%s284 + $0x1f0] sm:$0xff]
        %v898 = vld [vmem:[%s284 + $0x200] sm:$0xff]
        %v899 = vld [vmem:[%s284 + $0x210] sm:$0xff]
        %v900 = vld [vmem:[%s284 + $0x220] sm:$0xff]
        %v901 = vld [vmem:[%s284 + $0x230] sm:$0xff]
        %v902 = vld [vmem:[%s284 + $0x240] sm:$0xff]
        %v903 = vld [vmem:[%s284 + $0x250] sm:$0xff]
        %v904 = vld [vmem:[%s284 + $0x260] sm:$0xff]
        %v905 = vld [vmem:[%s284 + $0x270] sm:$0xff]
        %v906 = vld [vmem:[%s284 + $0x280] sm:$0xff]
        %v907 = vld [vmem:[%s284 + $0x290] sm:$0xff]
        %v908 = vld [vmem:[%s284 + $0x2a0] sm:$0xff]
        %v909 = vld [vmem:[%s284 + $0x2b0] sm:$0xff]
        %v910 = vld [vmem:[%s284 + $0x2c0] sm:$0xff]
        %v911 = vld [vmem:[%s284 + $0x2d0] sm:$0xff]
        %v912 = vld [vmem:[%s284 + $0x2e0] sm:$0xff]
        %v913 = vld [vmem:[%s284 + $0x2f0] sm:$0xff]
        %v914 = vld [vmem:[%s284 + $0x300] sm:$0xff]
        %v915 = vld [vmem:[%s284 + $0x310] sm:$0xff]
        %v916 = vld [vmem:[%s284 + $0x320] sm:$0xff]
        %v917 = vld [vmem:[%s284 + $0x330] sm:$0xff]
        %v918 = vld [vmem:[%s284 + $0x340] sm:$0xff]
        %v919 = vld [vmem:[%s284 + $0x350] sm:$0xff]
        %v920 = vld [vmem:[%s284 + $0x360] sm:$0xff]
        %v921 = vld [vmem:[%s284 + $0x370] sm:$0xff]
        %v922 = vld [vmem:[%s284 + $0x380] sm:$0xff]
        %v923 = vld [vmem:[%s284 + $0x390] sm:$0xff]
        %v924 = vld [vmem:[%s284 + $0x3a0] sm:$0xff]
        %v925 = vld [vmem:[%s284 + $0x3b0] sm:$0xff]
        %v926 = vld [vmem:[%s284 + $0x3c0] sm:$0xff]
        %v927 = vld [vmem:[%s284 + $0x3d0] sm:$0xff]
        %v928 = vld [vmem:[%s284 + $0x3e0] sm:$0xff]
        %v929 = vld [vmem:[%s284 + $0x3f0] sm:$0xff]
        %v994 = vunpack.c.l.b16 %v866
        %v995 = vunpack.c.h.b16 %v866
        %v996 = vunpack.c.l.b16 %v867
        %v997 = vunpack.c.h.b16 %v867
        %v998 = vunpack.c.l.b16 %v868
        %v999 = vunpack.c.h.b16 %v868
        %v1000 = vunpack.c.l.b16 %v869
        %v1001 = vunpack.c.h.b16 %v869
        %v1002 = vunpack.c.l.b16 %v870
        %v1003 = vunpack.c.h.b16 %v870
        %v1004 = vunpack.c.l.b16 %v871
        %v1005 = vunpack.c.h.b16 %v871
        %v1006 = vunpack.c.l.b16 %v872
        %v1007 = vunpack.c.h.b16 %v872
        %v1008 = vunpack.c.l.b16 %v873
        %v1009 = vunpack.c.h.b16 %v873
        %v1010 = vunpack.c.l.b16 %v874
        %v1011 = vunpack.c.h.b16 %v874
        %v1012 = vunpack.c.l.b16 %v875
        %v1013 = vunpack.c.h.b16 %v875
        %v1014 = vunpack.c.l.b16 %v876
        %v1015 = vunpack.c.h.b16 %v876
        %v1016 = vunpack.c.l.b16 %v877
        %v1017 = vunpack.c.h.b16 %v877
        %v1018 = vunpack.c.l.b16 %v878
        %v1019 = vunpack.c.h.b16 %v878
        %v1020 = vunpack.c.l.b16 %v879
        %v1021 = vunpack.c.h.b16 %v879
        %v1022 = vunpack.c.l.b16 %v880
        %v1023 = vunpack.c.h.b16 %v880
        %v1024 = vunpack.c.l.b16 %v881
        %v1025 = vunpack.c.h.b16 %v881
        %v1026 = vunpack.c.l.b16 %v882
        %v1027 = vunpack.c.h.b16 %v882
        %v1028 = vunpack.c.l.b16 %v883
        %v1029 = vunpack.c.h.b16 %v883
        %v1030 = vunpack.c.l.b16 %v884
        %v1031 = vunpack.c.h.b16 %v884
        %v1032 = vunpack.c.l.b16 %v885
        %v1033 = vunpack.c.h.b16 %v885
        %v1034 = vunpack.c.l.b16 %v886
        %v1035 = vunpack.c.h.b16 %v886
        %v1036 = vunpack.c.l.b16 %v887
        %v1037 = vunpack.c.h.b16 %v887
        %v1038 = vunpack.c.l.b16 %v888
        %v1039 = vunpack.c.h.b16 %v888
        %v1040 = vunpack.c.l.b16 %v889
        %v1041 = vunpack.c.h.b16 %v889
        %v1042 = vunpack.c.l.b16 %v890
        %v1043 = vunpack.c.h.b16 %v890
        %v1044 = vunpack.c.l.b16 %v891
        %v1045 = vunpack.c.h.b16 %v891
        %v1046 = vunpack.c.l.b16 %v892
        %v1047 = vunpack.c.h.b16 %v892
        %v1048 = vunpack.c.l.b16 %v893
        %v1049 = vunpack.c.h.b16 %v893
        %v1050 = vunpack.c.l.b16 %v894
        %v1051 = vunpack.c.h.b16 %v894
        %v1052 = vunpack.c.l.b16 %v895
        %v1053 = vunpack.c.h.b16 %v895
        %v1054 = vunpack.c.l.b16 %v896
        %v1055 = vunpack.c.h.b16 %v896
        %v1056 = vunpack.c.l.b16 %v897
        %v1057 = vunpack.c.h.b16 %v897
        %v1058 = vunpack.c.l.b16 %v898
        %v1059 = vunpack.c.h.b16 %v898
        %v1060 = vunpack.c.l.b16 %v899
        %v1061 = vunpack.c.h.b16 %v899
        %v1062 = vunpack.c.l.b16 %v900
        %v1063 = vunpack.c.h.b16 %v900
        %v1064 = vunpack.c.l.b16 %v901
        %v1065 = vunpack.c.h.b16 %v901
        %v1066 = vunpack.c.l.b16 %v902
        %v1067 = vunpack.c.h.b16 %v902
        %v1068 = vunpack.c.l.b16 %v903
        %v1069 = vunpack.c.h.b16 %v903
        %v1070 = vunpack.c.l.b16 %v904
        %v1071 = vunpack.c.h.b16 %v904
        %v1072 = vunpack.c.l.b16 %v905
        %v1073 = vunpack.c.h.b16 %v905
        %v1074 = vunpack.c.l.b16 %v906
        %v1075 = vunpack.c.h.b16 %v906
        %v1076 = vunpack.c.l.b16 %v907
        %v1077 = vunpack.c.h.b16 %v907
        %v1078 = vunpack.c.l.b16 %v908
        %v1079 = vunpack.c.h.b16 %v908
        %v1080 = vunpack.c.l.b16 %v909
        %v1081 = vunpack.c.h.b16 %v909
        %v1082 = vunpack.c.l.b16 %v910
        %v1083 = vunpack.c.h.b16 %v910
        %v1084 = vunpack.c.l.b16 %v911
        %v1085 = vunpack.c.h.b16 %v911
        %v1086 = vunpack.c.l.b16 %v912
        %v1087 = vunpack.c.h.b16 %v912
        %v1088 = vunpack.c.l.b16 %v913
        %v1089 = vunpack.c.h.b16 %v913
        %v1090 = vunpack.c.l.b16 %v914
        %v1091 = vunpack.c.h.b16 %v914
        %v1092 = vunpack.c.l.b16 %v915
        %v1093 = vunpack.c.h.b16 %v915
        %v1094 = vunpack.c.l.b16 %v916
        %v1095 = vunpack.c.h.b16 %v916
        %v1096 = vunpack.c.l.b16 %v917
        %v1097 = vunpack.c.h.b16 %v917
        %v1098 = vunpack.c.l.b16 %v918
        %v1099 = vunpack.c.h.b16 %v918
        %v1100 = vunpack.c.l.b16 %v919
        %v1101 = vunpack.c.h.b16 %v919
        %v1102 = vunpack.c.l.b16 %v920
        %v1103 = vunpack.c.h.b16 %v920
        %v1104 = vunpack.c.l.b16 %v921
        %v1105 = vunpack.c.h.b16 %v921
        %v1106 = vunpack.c.l.b16 %v922
        %v1107 = vunpack.c.h.b16 %v922
        %v1108 = vunpack.c.l.b16 %v923
        %v1109 = vunpack.c.h.b16 %v923
        %v1110 = vunpack.c.l.b16 %v924
        %v1111 = vunpack.c.h.b16 %v924
        %v1112 = vunpack.c.l.b16 %v925
        %v1113 = vunpack.c.h.b16 %v925
        %v1114 = vunpack.c.l.b16 %v926
        %v1115 = vunpack.c.h.b16 %v926
        %v1116 = vunpack.c.l.b16 %v927
        %v1117 = vunpack.c.h.b16 %v927
        %v1118 = vunpack.c.l.b16 %v928
        %v1119 = vunpack.c.h.b16 %v928
        %v1120 = vunpack.c.l.b16 %v929
        %v1121 = vunpack.c.h.b16 %v929
        %v1122 = vpack.c.b16 %v996, %v994
        %v1123 = vpack.c.b16 %v997, %v995
        %v1124 = vpack.c.b16 %v1000, %v998
        %v1125 = vpack.c.b16 %v1001, %v999
        %v1126 = vpack.c.b16 %v1004, %v1002
        %v1127 = vpack.c.b16 %v1005, %v1003
        %v1128 = vpack.c.b16 %v1008, %v1006
        %v1129 = vpack.c.b16 %v1009, %v1007
        %v1130 = vpack.c.b16 %v1012, %v1010
        %v1131 = vpack.c.b16 %v1013, %v1011
        %v1132 = vpack.c.b16 %v1016, %v1014
        %v1133 = vpack.c.b16 %v1017, %v1015
        %v1134 = vpack.c.b16 %v1020, %v1018
        %v1135 = vpack.c.b16 %v1021, %v1019
        %v1136 = vpack.c.b16 %v1024, %v1022
        %v1137 = vpack.c.b16 %v1025, %v1023
        %v1138 = vpack.c.b16 %v1028, %v1026
        %v1139 = vpack.c.b16 %v1029, %v1027
        %v1140 = vpack.c.b16 %v1032, %v1030
        %v1141 = vpack.c.b16 %v1033, %v1031
        %v1142 = vpack.c.b16 %v1036, %v1034
        %v1143 = vpack.c.b16 %v1037, %v1035
        %v1144 = vpack.c.b16 %v1040, %v1038
        %v1145 = vpack.c.b16 %v1041, %v1039
        %v1146 = vpack.c.b16 %v1044, %v1042
        %v1147 = vpack.c.b16 %v1045, %v1043
        %v1148 = vpack.c.b16 %v1048, %v1046
        %v1149 = vpack.c.b16 %v1049, %v1047
        %v1150 = vpack.c.b16 %v1052, %v1050
        %v1151 = vpack.c.b16 %v1053, %v1051
        %v1152 = vpack.c.b16 %v1056, %v1054
        %v1153 = vpack.c.b16 %v1057, %v1055
        %v1154 = vpack.c.b16 %v1060, %v1058
        %v1155 = vpack.c.b16 %v1061, %v1059
        %v1156 = vpack.c.b16 %v1064, %v1062
        %v1157 = vpack.c.b16 %v1065, %v1063
        %v1158 = vpack.c.b16 %v1068, %v1066
        %v1159 = vpack.c.b16 %v1069, %v1067
        %v1160 = vpack.c.b16 %v1072, %v1070
        %v1161 = vpack.c.b16 %v1073, %v1071
        %v1162 = vpack.c.b16 %v1076, %v1074
        %v1163 = vpack.c.b16 %v1077, %v1075
        %v1164 = vpack.c.b16 %v1080, %v1078
        %v1165 = vpack.c.b16 %v1081, %v1079
        %v1166 = vpack.c.b16 %v1084, %v1082
        %v1167 = vpack.c.b16 %v1085, %v1083
        %v1168 = vpack.c.b16 %v1088, %v1086
        %v1169 = vpack.c.b16 %v1089, %v1087
        %v1170 = vpack.c.b16 %v1092, %v1090
        %v1171 = vpack.c.b16 %v1093, %v1091
        %v1172 = vpack.c.b16 %v1096, %v1094
        %v1173 = vpack.c.b16 %v1097, %v1095
        %v1174 = vpack.c.b16 %v1100, %v1098
        %v1175 = vpack.c.b16 %v1101, %v1099
        %v1176 = vpack.c.b16 %v1104, %v1102
        %v1177 = vpack.c.b16 %v1105, %v1103
        %v1178 = vpack.c.b16 %v1108, %v1106
        %v1179 = vpack.c.b16 %v1109, %v1107
        %v1180 = vpack.c.b16 %v1112, %v1110
        %v1181 = vpack.c.b16 %v1113, %v1111
        %v1182 = vpack.c.b16 %v1116, %v1114
        %v1183 = vpack.c.b16 %v1117, %v1115
        %v1184 = vpack.c.b16 %v1120, %v1118
        %v1185 = vpack.c.b16 %v1121, %v1119
        %1250 = vmatprep.subr.bf16.mxu0 %v1137
        %1251 = vmatpush1.bf16.msra.mxu0 %v1136
        %1252 = vmatprep.subr.bf16.mxu0 %v1135
        %1253 = vmatpush1.bf16.msra.mxu0 %v1134
        %1254 = vmatprep.subr.bf16.mxu0 %v1133
        %1255 = vmatpush1.bf16.msra.mxu0 %v1132
        %1256 = vmatprep.subr.bf16.mxu0 %v1131
        %1257 = vmatpush1.bf16.msra.mxu0 %v1130
        %1258 = vmatprep.subr.bf16.mxu0 %v1129
        %1259 = vmatpush1.bf16.msra.mxu0 %v1128
        %1260 = vmatprep.subr.bf16.mxu0 %v1127
        %1261 = vmatpush1.bf16.msra.mxu0 %v1126
        %1262 = vmatprep.subr.bf16.mxu0 %v1125
        %1263 = vmatpush1.bf16.msra.mxu0 %v1124
        %1264 = vmatprep.subr.bf16.mxu0 %v1123
        %1265 = vmatpush1.bf16.msra.mxu0 %v1122
        %1266 = vmatprep.subr.bf16.mxu0 %v1153
        %1267 = vmatpush2.bf16.msra.mxu0 %v1152
        %1268 = vmatprep.subr.bf16.mxu0 %v1151
        %1269 = vmatpush2.bf16.msra.mxu0 %v1150
        %1270 = vmatprep.subr.bf16.mxu0 %v1149
        %1271 = vmatpush2.bf16.msra.mxu0 %v1148
        %1272 = vmatprep.subr.bf16.mxu0 %v1147
        %1273 = vmatpush2.bf16.msra.mxu0 %v1146
        %1274 = vmatprep.subr.bf16.mxu0 %v1145
        %1275 = vmatpush2.bf16.msra.mxu0 %v1144
        %1276 = vmatprep.subr.bf16.mxu0 %v1143
        %1277 = vmatpush2.bf16.msra.mxu0 %v1142
        %1278 = vmatprep.subr.bf16.mxu0 %v1141
        %1279 = vmatpush2.bf16.msra.mxu0 %v1140
        %1280 = vmatprep.subr.bf16.mxu0 %v1139
        %1281 = vmatpush2.bf16.msra.mxu0 %v1138
        %1282 = vmatprep.mubr.bf16.mxu0 %v425
        %1283 = vmatmul.mubr.bf16.gmra.mxu0 %v424
        %v1284 = vpop.f32.mrf.mxu0
        %v1285 = vadd.f32 0.0, %v1284
        %v1286 = vpop.f32.mrf.mxu0
        %v1287 = vadd.f32 0.0, %v1286
        %v1288 = vpop.f32.mrf.mxu0
        %v1289 = vadd.f32 0.0, %v1288
        %v1290 = vpop.f32.mrf.mxu0
        %v1291 = vadd.f32 0.0, %v1290
        %1292 = vmatprep.mubr.bf16.mxu0 %v429
        %1293 = vmatmul.mubr.bf16.gmra.mxu0 %v428
        %v1294 = vpop.f32.mrf.mxu0
        %v1295 = vadd.f32 0.0, %v1294
        %v1296 = vpop.f32.mrf.mxu0
        %v1297 = vadd.f32 0.0, %v1296
        %v1298 = vpop.f32.mrf.mxu0
        %v1299 = vadd.f32 0.0, %v1298
        %v1300 = vpop.f32.mrf.mxu0
        %v1301 = vadd.f32 0.0, %v1300
        %1302 = vdwg.mxu0
        %1303 = vmatprep.subr.bf16.mxu0 %v1169
        %1304 = vmatpush1.bf16.msra.mxu0 %v1168
        %1305 = vmatprep.subr.bf16.mxu0 %v1167
        %1306 = vmatpush1.bf16.msra.mxu0 %v1166
        %1307 = vmatprep.subr.bf16.mxu0 %v1165
        %1308 = vmatpush1.bf16.msra.mxu0 %v1164
        %1309 = vmatprep.subr.bf16.mxu0 %v1163
        %1310 = vmatpush1.bf16.msra.mxu0 %v1162
        %1311 = vmatprep.subr.bf16.mxu0 %v1161
        %1312 = vmatpush1.bf16.msra.mxu0 %v1160
        %1313 = vmatprep.subr.bf16.mxu0 %v1159
        %1314 = vmatpush1.bf16.msra.mxu0 %v1158
        %1315 = vmatprep.subr.bf16.mxu0 %v1157
        %1316 = vmatpush1.bf16.msra.mxu0 %v1156
        %1317 = vmatprep.subr.bf16.mxu0 %v1155
        %1318 = vmatpush1.bf16.msra.mxu0 %v1154
        %1319 = vmatprep.subr.bf16.mxu0 %v1185
        %1320 = vmatpush2.bf16.msra.mxu0 %v1184
        %1321 = vmatprep.subr.bf16.mxu0 %v1183
        %1322 = vmatpush2.bf16.msra.mxu0 %v1182
        %1323 = vmatprep.subr.bf16.mxu0 %v1181
        %1324 = vmatpush2.bf16.msra.mxu0 %v1180
        %1325 = vmatprep.subr.bf16.mxu0 %v1179
        %1326 = vmatpush2.bf16.msra.mxu0 %v1178
        %1327 = vmatprep.subr.bf16.mxu0 %v1177
        %1328 = vmatpush2.bf16.msra.mxu0 %v1176
        %1329 = vmatprep.subr.bf16.mxu0 %v1175
        %1330 = vmatpush2.bf16.msra.mxu0 %v1174
        %1331 = vmatprep.subr.bf16.mxu0 %v1173
        %1332 = vmatpush2.bf16.msra.mxu0 %v1172
        %1333 = vmatprep.subr.bf16.mxu0 %v1171
        %1334 = vmatpush2.bf16.msra.mxu0 %v1170
        %1335 = vmatprep.mubr.bf16.mxu0 %v427
        %1336 = vmatmul.mubr.bf16.gmra.mxu0 %v426
        %v1337 = vpop.f32.mrf.mxu0
        %v1338 = vadd.f32 %v1285, %v1337
        %v1339 = vpop.f32.mrf.mxu0
        %v1340 = vadd.f32 %v1287, %v1339
        %v1341 = vpop.f32.mrf.mxu0
        %v1342 = vadd.f32 %v1289, %v1341
        %v1343 = vpop.f32.mrf.mxu0
        %v1344 = vadd.f32 %v1291, %v1343
        %1345 = vmatprep.mubr.bf16.mxu0 %v431
        %1346 = vmatmul.mubr.bf16.gmra.mxu0 %v430
        %v1347 = vpop.f32.mrf.mxu0
        %v1348 = vadd.f32 %v1295, %v1347
        %v1349 = vpop.f32.mrf.mxu0
        %v1350 = vadd.f32 %v1297, %v1349
        %v1351 = vpop.f32.mrf.mxu0
        %v1352 = vadd.f32 %v1299, %v1351
        %v1353 = vpop.f32.mrf.mxu0
        %v1354 = vadd.f32 %v1301, %v1353
        %1355 = vdwg.mxu0
        %v1356 = vxor.u32 %v848, 2147483648
        %v1357 = vxor.u32 %v850, 2147483648
        %v1358 = vxor.u32 %v852, 2147483648
        %v1359 = vxor.u32 %v854, 2147483648
        %v1360 = vxor.u32 %v858, 2147483648
        %v1361 = vxor.u32 %v860, 2147483648
        %v1362 = vxor.u32 %v862, 2147483648
        %v1363 = vxor.u32 %v864, 2147483648
        %v1364 = vmul.f32 %v1356, 1.442695
        %v1365 = vpow.pop %v1364
        %v1366 = vmul.f32 %v1357, 1.442695
        %v1367 = vpow.pop %v1366
        %v1368 = vmul.f32 %v1358, 1.442695
        %v1369 = vpow.pop %v1368
        %v1370 = vmul.f32 %v1359, 1.442695
        %v1371 = vpow.pop %v1370
        %v1372 = vmul.f32 %v1360, 1.442695
        %v1373 = vpow.pop %v1372
        %v1374 = vmul.f32 %v1361, 1.442695
        %v1375 = vpow.pop %v1374
        %v1376 = vmul.f32 %v1362, 1.442695
        %v1377 = vpow.pop %v1376
        %v1378 = vmul.f32 %v1363, 1.442695
        %v1379 = vpow.pop %v1378
        %v1380 = vadd.f32 %v1365, 1.0
        %v1381 = vadd.f32 %v1367, 1.0
        %v1382 = vadd.f32 %v1369, 1.0
        %v1383 = vadd.f32 %v1371, 1.0
        %v1384 = vadd.f32 %v1373, 1.0
        %v1385 = vadd.f32 %v1375, 1.0
        %v1386 = vadd.f32 %v1377, 1.0
        %v1387 = vadd.f32 %v1379, 1.0
        %v1388 = vrcp.pop %v1380
        %v1389 = vmul.f32 1.0, %v1388
        %v1390 = vrcp.pop %v1381
        %v1391 = vmul.f32 1.0, %v1390
        %v1392 = vrcp.pop %v1382
        %v1393 = vmul.f32 1.0, %v1392
        %v1394 = vrcp.pop %v1383
        %v1395 = vmul.f32 1.0, %v1394
        %v1396 = vrcp.pop %v1384
        %v1397 = vmul.f32 1.0, %v1396
        %v1398 = vrcp.pop %v1385
        %v1399 = vmul.f32 1.0, %v1398
        %v1400 = vrcp.pop %v1386
        %v1401 = vmul.f32 1.0, %v1400
        %v1402 = vrcp.pop %v1387
        %v1403 = vmul.f32 1.0, %v1402
        %v1404 = vmul.f32 %v848, %v1389
        %v1405 = vmul.f32 %v850, %v1391
        %v1406 = vmul.f32 %v852, %v1393
        %v1407 = vmul.f32 %v854, %v1395
        %v1408 = vmul.f32 %v858, %v1397
        %v1409 = vmul.f32 %v860, %v1399
        %v1410 = vmul.f32 %v862, %v1401
        %v1411 = vmul.f32 %v864, %v1403
        %v1412 = vmul.f32 %v1404, %v1338
        %v1413 = vmul.f32 %v1405, %v1340
        %v1414 = vmul.f32 %v1406, %v1342
        %v1415 = vmul.f32 %v1407, %v1344
        %v1416 = vmul.f32 %v1408, %v1348
        %v1417 = vmul.f32 %v1409, %v1350
        %v1418 = vmul.f32 %v1410, %v1352
        %v1419 = vmul.f32 %v1411, %v1354
        %v1420 = vpack.c.bf16 %v1414, %v1412
        %v1421 = vpack.c.bf16 %v1415, %v1413
        %v1422 = vpack.c.bf16 %v1418, %v1416
        %v1423 = vpack.c.bf16 %v1419, %v1417
        %s1424 = smul.u32 0, 4
        %s1425 = smul.addr %s1424, 4
        %s1426 = scalar_lea.vmem %s293, %s1425 [#allocation8]
        %v1427 = vld [vmem:[%s1426] sm:$0xff]
        %v1428 = vld [vmem:[%s1426 + $0x8] sm:$0xff]
        %v1429 = vld [vmem:[%s1426 + $0x10] sm:$0xff]
        %v1430 = vld [vmem:[%s1426 + $0x18] sm:$0xff]
        %v1431 = vld [vmem:[%s1426 + $0x20] sm:$0xff]
        %v1432 = vld [vmem:[%s1426 + $0x28] sm:$0xff]
        %v1433 = vld [vmem:[%s1426 + $0x30] sm:$0xff]
        %v1434 = vld [vmem:[%s1426 + $0x38] sm:$0xff]
        %v1435 = vld [vmem:[%s1426 + $0x40] sm:$0xff]
        %v1436 = vld [vmem:[%s1426 + $0x48] sm:$0xff]
        %v1437 = vld [vmem:[%s1426 + $0x50] sm:$0xff]
        %v1438 = vld [vmem:[%s1426 + $0x58] sm:$0xff]
        %v1439 = vld [vmem:[%s1426 + $0x60] sm:$0xff]
        %v1440 = vld [vmem:[%s1426 + $0x68] sm:$0xff]
        %v1441 = vld [vmem:[%s1426 + $0x70] sm:$0xff]
        %v1442 = vld [vmem:[%s1426 + $0x78] sm:$0xff]
        %v1443 = vld [vmem:[%s1426 + $0x80] sm:$0xff]
        %v1444 = vld [vmem:[%s1426 + $0x88] sm:$0xff]
        %v1445 = vld [vmem:[%s1426 + $0x90] sm:$0xff]
        %v1446 = vld [vmem:[%s1426 + $0x98] sm:$0xff]
        %v1447 = vld [vmem:[%s1426 + $0xa0] sm:$0xff]
        %v1448 = vld [vmem:[%s1426 + $0xa8] sm:$0xff]
        %v1449 = vld [vmem:[%s1426 + $0xb0] sm:$0xff]
        %v1450 = vld [vmem:[%s1426 + $0xb8] sm:$0xff]
        %v1451 = vld [vmem:[%s1426 + $0xc0] sm:$0xff]
        %v1452 = vld [vmem:[%s1426 + $0xc8] sm:$0xff]
        %v1453 = vld [vmem:[%s1426 + $0xd0] sm:$0xff]
        %v1454 = vld [vmem:[%s1426 + $0xd8] sm:$0xff]
        %v1455 = vld [vmem:[%s1426 + $0xe0] sm:$0xff]
        %v1456 = vld [vmem:[%s1426 + $0xe8] sm:$0xff]
        %v1457 = vld [vmem:[%s1426 + $0xf0] sm:$0xff]
        %v1458 = vld [vmem:[%s1426 + $0xf8] sm:$0xff]
        %v1459 = vld [vmem:[%s1426 + $0x100] sm:$0xff]
        %v1460 = vld [vmem:[%s1426 + $0x108] sm:$0xff]
        %v1461 = vld [vmem:[%s1426 + $0x110] sm:$0xff]
        %v1462 = vld [vmem:[%s1426 + $0x118] sm:$0xff]
        %v1463 = vld [vmem:[%s1426 + $0x120] sm:$0xff]
        %v1464 = vld [vmem:[%s1426 + $0x128] sm:$0xff]
        %v1465 = vld [vmem:[%s1426 + $0x130] sm:$0xff]
        %v1466 = vld [vmem:[%s1426 + $0x138] sm:$0xff]
        %v1467 = vld [vmem:[%s1426 + $0x140] sm:$0xff]
        %v1468 = vld [vmem:[%s1426 + $0x148] sm:$0xff]
        %v1469 = vld [vmem:[%s1426 + $0x150] sm:$0xff]
        %v1470 = vld [vmem:[%s1426 + $0x158] sm:$0xff]
        %v1471 = vld [vmem:[%s1426 + $0x160] sm:$0xff]
        %v1472 = vld [vmem:[%s1426 + $0x168] sm:$0xff]
        %v1473 = vld [vmem:[%s1426 + $0x170] sm:$0xff]
        %v1474 = vld [vmem:[%s1426 + $0x178] sm:$0xff]
        %v1475 = vld [vmem:[%s1426 + $0x180] sm:$0xff]
        %v1476 = vld [vmem:[%s1426 + $0x188] sm:$0xff]
        %v1477 = vld [vmem:[%s1426 + $0x190] sm:$0xff]
        %v1478 = vld [vmem:[%s1426 + $0x198] sm:$0xff]
        %v1479 = vld [vmem:[%s1426 + $0x1a0] sm:$0xff]
        %v1480 = vld [vmem:[%s1426 + $0x1a8] sm:$0xff]
        %v1481 = vld [vmem:[%s1426 + $0x1b0] sm:$0xff]
        %v1482 = vld [vmem:[%s1426 + $0x1b8] sm:$0xff]
        %v1483 = vld [vmem:[%s1426 + $0x1c0] sm:$0xff]
        %v1484 = vld [vmem:[%s1426 + $0x1c8] sm:$0xff]
        %v1485 = vld [vmem:[%s1426 + $0x1d0] sm:$0xff]
        %v1486 = vld [vmem:[%s1426 + $0x1d8] sm:$0xff]
        %v1487 = vld [vmem:[%s1426 + $0x1e0] sm:$0xff]
        %v1488 = vld [vmem:[%s1426 + $0x1e8] sm:$0xff]
        %v1489 = vld [vmem:[%s1426 + $0x1f0] sm:$0xff]
        %v1490 = vld [vmem:[%s1426 + $0x1f8] sm:$0xff]
        %s1491 = scalar_lea.vmem %s275, 8 [#allocation5]
        %v1492 = vld [vmem:[%s1491] sm:$0xff]
        %v1493 = vld [vmem:[%s1491 + $0x10] sm:$0xff]
        %v1494 = vld [vmem:[%s1491 + $0x20] sm:$0xff]
        %v1495 = vld [vmem:[%s1491 + $0x30] sm:$0xff]
        %v1496 = vld [vmem:[%s1491 + $0x40] sm:$0xff]
        %v1497 = vld [vmem:[%s1491 + $0x50] sm:$0xff]
        %v1498 = vld [vmem:[%s1491 + $0x60] sm:$0xff]
        %v1499 = vld [vmem:[%s1491 + $0x70] sm:$0xff]
        %v1500 = vld [vmem:[%s1491 + $0x80] sm:$0xff]
        %v1501 = vld [vmem:[%s1491 + $0x90] sm:$0xff]
        %v1502 = vld [vmem:[%s1491 + $0xa0] sm:$0xff]
        %v1503 = vld [vmem:[%s1491 + $0xb0] sm:$0xff]
        %v1504 = vld [vmem:[%s1491 + $0xc0] sm:$0xff]
        %v1505 = vld [vmem:[%s1491 + $0xd0] sm:$0xff]
        %v1506 = vld [vmem:[%s1491 + $0xe0] sm:$0xff]
        %v1507 = vld [vmem:[%s1491 + $0xf0] sm:$0xff]
        %v1508 = vld [vmem:[%s1491 + $0x100] sm:$0xff]
        %v1509 = vld [vmem:[%s1491 + $0x110] sm:$0xff]
        %v1510 = vld [vmem:[%s1491 + $0x120] sm:$0xff]
        %v1511 = vld [vmem:[%s1491 + $0x130] sm:$0xff]
        %v1512 = vld [vmem:[%s1491 + $0x140] sm:$0xff]
        %v1513 = vld [vmem:[%s1491 + $0x150] sm:$0xff]
        %v1514 = vld [vmem:[%s1491 + $0x160] sm:$0xff]
        %v1515 = vld [vmem:[%s1491 + $0x170] sm:$0xff]
        %v1516 = vld [vmem:[%s1491 + $0x180] sm:$0xff]
        %v1517 = vld [vmem:[%s1491 + $0x190] sm:$0xff]
        %v1518 = vld [vmem:[%s1491 + $0x1a0] sm:$0xff]
        %v1519 = vld [vmem:[%s1491 + $0x1b0] sm:$0xff]
        %v1520 = vld [vmem:[%s1491 + $0x1c0] sm:$0xff]
        %v1521 = vld [vmem:[%s1491 + $0x1d0] sm:$0xff]
        %v1522 = vld [vmem:[%s1491 + $0x1e0] sm:$0xff]
        %v1523 = vld [vmem:[%s1491 + $0x1f0] sm:$0xff]
        %v1524 = vld [vmem:[%s1491 + $0x200] sm:$0xff]
        %v1525 = vld [vmem:[%s1491 + $0x210] sm:$0xff]
        %v1526 = vld [vmem:[%s1491 + $0x220] sm:$0xff]
        %v1527 = vld [vmem:[%s1491 + $0x230] sm:$0xff]
        %v1528 = vld [vmem:[%s1491 + $0x240] sm:$0xff]
        %v1529 = vld [vmem:[%s1491 + $0x250] sm:$0xff]
        %v1530 = vld [vmem:[%s1491 + $0x260] sm:$0xff]
        %v1531 = vld [vmem:[%s1491 + $0x270] sm:$0xff]
        %v1532 = vld [vmem:[%s1491 + $0x280] sm:$0xff]
        %v1533 = vld [vmem:[%s1491 + $0x290] sm:$0xff]
        %v1534 = vld [vmem:[%s1491 + $0x2a0] sm:$0xff]
        %v1535 = vld [vmem:[%s1491 + $0x2b0] sm:$0xff]
        %v1536 = vld [vmem:[%s1491 + $0x2c0] sm:$0xff]
        %v1537 = vld [vmem:[%s1491 + $0x2d0] sm:$0xff]
        %v1538 = vld [vmem:[%s1491 + $0x2e0] sm:$0xff]
        %v1539 = vld [vmem:[%s1491 + $0x2f0] sm:$0xff]
        %v1540 = vld [vmem:[%s1491 + $0x300] sm:$0xff]
        %v1541 = vld [vmem:[%s1491 + $0x310] sm:$0xff]
        %v1542 = vld [vmem:[%s1491 + $0x320] sm:$0xff]
        %v1543 = vld [vmem:[%s1491 + $0x330] sm:$0xff]
        %v1544 = vld [vmem:[%s1491 + $0x340] sm:$0xff]
        %v1545 = vld [vmem:[%s1491 + $0x350] sm:$0xff]
        %v1546 = vld [vmem:[%s1491 + $0x360] sm:$0xff]
        %v1547 = vld [vmem:[%s1491 + $0x370] sm:$0xff]
        %v1548 = vld [vmem:[%s1491 + $0x380] sm:$0xff]
        %v1549 = vld [vmem:[%s1491 + $0x390] sm:$0xff]
        %v1550 = vld [vmem:[%s1491 + $0x3a0] sm:$0xff]
        %v1551 = vld [vmem:[%s1491 + $0x3b0] sm:$0xff]
        %v1552 = vld [vmem:[%s1491 + $0x3c0] sm:$0xff]
        %v1553 = vld [vmem:[%s1491 + $0x3d0] sm:$0xff]
        %v1554 = vld [vmem:[%s1491 + $0x3e0] sm:$0xff]
        %v1555 = vld [vmem:[%s1491 + $0x3f0] sm:$0xff]
        %v1620 = vunpack.c.l.b16 %v1492
        %v1621 = vunpack.c.h.b16 %v1492
        %v1622 = vunpack.c.l.b16 %v1493
        %v1623 = vunpack.c.h.b16 %v1493
        %v1624 = vunpack.c.l.b16 %v1494
        %v1625 = vunpack.c.h.b16 %v1494
        %v1626 = vunpack.c.l.b16 %v1495
        %v1627 = vunpack.c.h.b16 %v1495
        %v1628 = vunpack.c.l.b16 %v1496
        %v1629 = vunpack.c.h.b16 %v1496
        %v1630 = vunpack.c.l.b16 %v1497
        %v1631 = vunpack.c.h.b16 %v1497
        %v1632 = vunpack.c.l.b16 %v1498
        %v1633 = vunpack.c.h.b16 %v1498
        %v1634 = vunpack.c.l.b16 %v1499
        %v1635 = vunpack.c.h.b16 %v1499
        %v1636 = vunpack.c.l.b16 %v1500
        %v1637 = vunpack.c.h.b16 %v1500
        %v1638 = vunpack.c.l.b16 %v1501
        %v1639 = vunpack.c.h.b16 %v1501
        %v1640 = vunpack.c.l.b16 %v1502
        %v1641 = vunpack.c.h.b16 %v1502
        %v1642 = vunpack.c.l.b16 %v1503
        %v1643 = vunpack.c.h.b16 %v1503
        %v1644 = vunpack.c.l.b16 %v1504
        %v1645 = vunpack.c.h.b16 %v1504
        %v1646 = vunpack.c.l.b16 %v1505
        %v1647 = vunpack.c.h.b16 %v1505
        %v1648 = vunpack.c.l.b16 %v1506
        %v1649 = vunpack.c.h.b16 %v1506
        %v1650 = vunpack.c.l.b16 %v1507
        %v1651 = vunpack.c.h.b16 %v1507
        %v1652 = vunpack.c.l.b16 %v1508
        %v1653 = vunpack.c.h.b16 %v1508
        %v1654 = vunpack.c.l.b16 %v1509
        %v1655 = vunpack.c.h.b16 %v1509
        %v1656 = vunpack.c.l.b16 %v1510
        %v1657 = vunpack.c.h.b16 %v1510
        %v1658 = vunpack.c.l.b16 %v1511
        %v1659 = vunpack.c.h.b16 %v1511
        %v1660 = vunpack.c.l.b16 %v1512
        %v1661 = vunpack.c.h.b16 %v1512
        %v1662 = vunpack.c.l.b16 %v1513
        %v1663 = vunpack.c.h.b16 %v1513
        %v1664 = vunpack.c.l.b16 %v1514
        %v1665 = vunpack.c.h.b16 %v1514
        %v1666 = vunpack.c.l.b16 %v1515
        %v1667 = vunpack.c.h.b16 %v1515
        %v1668 = vunpack.c.l.b16 %v1516
        %v1669 = vunpack.c.h.b16 %v1516
        %v1670 = vunpack.c.l.b16 %v1517
        %v1671 = vunpack.c.h.b16 %v1517
        %v1672 = vunpack.c.l.b16 %v1518
        %v1673 = vunpack.c.h.b16 %v1518
        %v1674 = vunpack.c.l.b16 %v1519
        %v1675 = vunpack.c.h.b16 %v1519
        %v1676 = vunpack.c.l.b16 %v1520
        %v1677 = vunpack.c.h.b16 %v1520
        %v1678 = vunpack.c.l.b16 %v1521
        %v1679 = vunpack.c.h.b16 %v1521
        %v1680 = vunpack.c.l.b16 %v1522
        %v1681 = vunpack.c.h.b16 %v1522
        %v1682 = vunpack.c.l.b16 %v1523
        %v1683 = vunpack.c.h.b16 %v1523
        %v1684 = vunpack.c.l.b16 %v1524
        %v1685 = vunpack.c.h.b16 %v1524
        %v1686 = vunpack.c.l.b16 %v1525
        %v1687 = vunpack.c.h.b16 %v1525
        %v1688 = vunpack.c.l.b16 %v1526
        %v1689 = vunpack.c.h.b16 %v1526
        %v1690 = vunpack.c.l.b16 %v1527
        %v1691 = vunpack.c.h.b16 %v1527
        %v1692 = vunpack.c.l.b16 %v1528
        %v1693 = vunpack.c.h.b16 %v1528
        %v1694 = vunpack.c.l.b16 %v1529
        %v1695 = vunpack.c.h.b16 %v1529
        %v1696 = vunpack.c.l.b16 %v1530
        %v1697 = vunpack.c.h.b16 %v1530
        %v1698 = vunpack.c.l.b16 %v1531
        %v1699 = vunpack.c.h.b16 %v1531
        %v1700 = vunpack.c.l.b16 %v1532
        %v1701 = vunpack.c.h.b16 %v1532
        %v1702 = vunpack.c.l.b16 %v1533
        %v1703 = vunpack.c.h.b16 %v1533
        %v1704 = vunpack.c.l.b16 %v1534
        %v1705 = vunpack.c.h.b16 %v1534
        %v1706 = vunpack.c.l.b16 %v1535
        %v1707 = vunpack.c.h.b16 %v1535
        %v1708 = vunpack.c.l.b16 %v1536
        %v1709 = vunpack.c.h.b16 %v1536
        %v1710 = vunpack.c.l.b16 %v1537
        %v1711 = vunpack.c.h.b16 %v1537
        %v1712 = vunpack.c.l.b16 %v1538
        %v1713 = vunpack.c.h.b16 %v1538
        %v1714 = vunpack.c.l.b16 %v1539
        %v1715 = vunpack.c.h.b16 %v1539
        %v1716 = vunpack.c.l.b16 %v1540
        %v1717 = vunpack.c.h.b16 %v1540
        %v1718 = vunpack.c.l.b16 %v1541
        %v1719 = vunpack.c.h.b16 %v1541
        %v1720 = vunpack.c.l.b16 %v1542
        %v1721 = vunpack.c.h.b16 %v1542
        %v1722 = vunpack.c.l.b16 %v1543
        %v1723 = vunpack.c.h.b16 %v1543
        %v1724 = vunpack.c.l.b16 %v1544
        %v1725 = vunpack.c.h.b16 %v1544
        %v1726 = vunpack.c.l.b16 %v1545
        %v1727 = vunpack.c.h.b16 %v1545
        %v1728 = vunpack.c.l.b16 %v1546
        %v1729 = vunpack.c.h.b16 %v1546
        %v1730 = vunpack.c.l.b16 %v1547
        %v1731 = vunpack.c.h.b16 %v1547
        %v1732 = vunpack.c.l.b16 %v1548
        %v1733 = vunpack.c.h.b16 %v1548
        %v1734 = vunpack.c.l.b16 %v1549
        %v1735 = vunpack.c.h.b16 %v1549
        %v1736 = vunpack.c.l.b16 %v1550
        %v1737 = vunpack.c.h.b16 %v1550
        %v1738 = vunpack.c.l.b16 %v1551
        %v1739 = vunpack.c.h.b16 %v1551
        %v1740 = vunpack.c.l.b16 %v1552
        %v1741 = vunpack.c.h.b16 %v1552
        %v1742 = vunpack.c.l.b16 %v1553
        %v1743 = vunpack.c.h.b16 %v1553
        %v1744 = vunpack.c.l.b16 %v1554
        %v1745 = vunpack.c.h.b16 %v1554
        %v1746 = vunpack.c.l.b16 %v1555
        %v1747 = vunpack.c.h.b16 %v1555
        %v1748 = vpack.c.b16 %v1622, %v1620
        %v1749 = vpack.c.b16 %v1623, %v1621
        %v1750 = vpack.c.b16 %v1626, %v1624
        %v1751 = vpack.c.b16 %v1627, %v1625
        %v1752 = vpack.c.b16 %v1630, %v1628
        %v1753 = vpack.c.b16 %v1631, %v1629
        %v1754 = vpack.c.b16 %v1634, %v1632
        %v1755 = vpack.c.b16 %v1635, %v1633
        %v1756 = vpack.c.b16 %v1638, %v1636
        %v1757 = vpack.c.b16 %v1639, %v1637
        %v1758 = vpack.c.b16 %v1642, %v1640
        %v1759 = vpack.c.b16 %v1643, %v1641
        %v1760 = vpack.c.b16 %v1646, %v1644
        %v1761 = vpack.c.b16 %v1647, %v1645
        %v1762 = vpack.c.b16 %v1650, %v1648
        %v1763 = vpack.c.b16 %v1651, %v1649
        %v1764 = vpack.c.b16 %v1654, %v1652
        %v1765 = vpack.c.b16 %v1655, %v1653
        %v1766 = vpack.c.b16 %v1658, %v1656
        %v1767 = vpack.c.b16 %v1659, %v1657
        %v1768 = vpack.c.b16 %v1662, %v1660
        %v1769 = vpack.c.b16 %v1663, %v1661
        %v1770 = vpack.c.b16 %v1666, %v1664
        %v1771 = vpack.c.b16 %v1667, %v1665
        %v1772 = vpack.c.b16 %v1670, %v1668
        %v1773 = vpack.c.b16 %v1671, %v1669
        %v1774 = vpack.c.b16 %v1674, %v1672
        %v1775 = vpack.c.b16 %v1675, %v1673
        %v1776 = vpack.c.b16 %v1678, %v1676
        %v1777 = vpack.c.b16 %v1679, %v1677
        %v1778 = vpack.c.b16 %v1682, %v1680
        %v1779 = vpack.c.b16 %v1683, %v1681
        %v1780 = vpack.c.b16 %v1686, %v1684
        %v1781 = vpack.c.b16 %v1687, %v1685
        %v1782 = vpack.c.b16 %v1690, %v1688
        %v1783 = vpack.c.b16 %v1691, %v1689
        %v1784 = vpack.c.b16 %v1694, %v1692
        %v1785 = vpack.c.b16 %v1695, %v1693
        %v1786 = vpack.c.b16 %v1698, %v1696
        %v1787 = vpack.c.b16 %v1699, %v1697
        %v1788 = vpack.c.b16 %v1702, %v1700
        %v1789 = vpack.c.b16 %v1703, %v1701
        %v1790 = vpack.c.b16 %v1706, %v1704
        %v1791 = vpack.c.b16 %v1707, %v1705
        %v1792 = vpack.c.b16 %v1710, %v1708
        %v1793 = vpack.c.b16 %v1711, %v1709
        %v1794 = vpack.c.b16 %v1714, %v1712
        %v1795 = vpack.c.b16 %v1715, %v1713
        %v1796 = vpack.c.b16 %v1718, %v1716
        %v1797 = vpack.c.b16 %v1719, %v1717
        %v1798 = vpack.c.b16 %v1722, %v1720
        %v1799 = vpack.c.b16 %v1723, %v1721
        %v1800 = vpack.c.b16 %v1726, %v1724
        %v1801 = vpack.c.b16 %v1727, %v1725
        %v1802 = vpack.c.b16 %v1730, %v1728
        %v1803 = vpack.c.b16 %v1731, %v1729
        %v1804 = vpack.c.b16 %v1734, %v1732
        %v1805 = vpack.c.b16 %v1735, %v1733
        %v1806 = vpack.c.b16 %v1738, %v1736
        %v1807 = vpack.c.b16 %v1739, %v1737
        %v1808 = vpack.c.b16 %v1742, %v1740
        %v1809 = vpack.c.b16 %v1743, %v1741
        %v1810 = vpack.c.b16 %v1746, %v1744
        %v1811 = vpack.c.b16 %v1747, %v1745
        %1876 = vmatprep.subr.bf16.mxu0 %v1763
        %1877 = vmatpush1.bf16.msra.mxu0 %v1762
        %1878 = vmatprep.subr.bf16.mxu0 %v1761
        %1879 = vmatpush1.bf16.msra.mxu0 %v1760
        %1880 = vmatprep.subr.bf16.mxu0 %v1759
        %1881 = vmatpush1.bf16.msra.mxu0 %v1758
        %1882 = vmatprep.subr.bf16.mxu0 %v1757
        %1883 = vmatpush1.bf16.msra.mxu0 %v1756
        %1884 = vmatprep.subr.bf16.mxu0 %v1755
        %1885 = vmatpush1.bf16.msra.mxu0 %v1754
        %1886 = vmatprep.subr.bf16.mxu0 %v1753
        %1887 = vmatpush1.bf16.msra.mxu0 %v1752
        %1888 = vmatprep.subr.bf16.mxu0 %v1751
        %1889 = vmatpush1.bf16.msra.mxu0 %v1750
        %1890 = vmatprep.subr.bf16.mxu0 %v1749
        %1891 = vmatpush1.bf16.msra.mxu0 %v1748
        %1892 = vmatprep.subr.bf16.mxu0 %v1779
        %1893 = vmatpush2.bf16.msra.mxu0 %v1778
        %1894 = vmatprep.subr.bf16.mxu0 %v1777
        %1895 = vmatpush2.bf16.msra.mxu0 %v1776
        %1896 = vmatprep.subr.bf16.mxu0 %v1775
        %1897 = vmatpush2.bf16.msra.mxu0 %v1774
        %1898 = vmatprep.subr.bf16.mxu0 %v1773
        %1899 = vmatpush2.bf16.msra.mxu0 %v1772
        %1900 = vmatprep.subr.bf16.mxu0 %v1771
        %1901 = vmatpush2.bf16.msra.mxu0 %v1770
        %1902 = vmatprep.subr.bf16.mxu0 %v1769
        %1903 = vmatpush2.bf16.msra.mxu0 %v1768
        %1904 = vmatprep.subr.bf16.mxu0 %v1767
        %1905 = vmatpush2.bf16.msra.mxu0 %v1766
        %1906 = vmatprep.subr.bf16.mxu0 %v1765
        %1907 = vmatpush2.bf16.msra.mxu0 %v1764
        %1908 = vmatprep.mubr.bf16.mxu0 %v425
        %1909 = vmatmul.mubr.bf16.gmra.mxu0 %v424
        %v1910 = vpop.f32.mrf.mxu0
        %v1911 = vadd.f32 0.0, %v1910
        %v1912 = vpop.f32.mrf.mxu0
        %v1913 = vadd.f32 0.0, %v1912
        %v1914 = vpop.f32.mrf.mxu0
        %v1915 = vadd.f32 0.0, %v1914
        %v1916 = vpop.f32.mrf.mxu0
        %v1917 = vadd.f32 0.0, %v1916
        %1918 = vmatprep.mubr.bf16.mxu0 %v429
        %1919 = vmatmul.mubr.bf16.gmra.mxu0 %v428
        %v1920 = vpop.f32.mrf.mxu0
        %v1921 = vadd.f32 0.0, %v1920
        %v1922 = vpop.f32.mrf.mxu0
        %v1923 = vadd.f32 0.0, %v1922
        %v1924 = vpop.f32.mrf.mxu0
        %v1925 = vadd.f32 0.0, %v1924
        %v1926 = vpop.f32.mrf.mxu0
        %v1927 = vadd.f32 0.0, %v1926
        %1928 = vdwg.mxu0
        %1929 = vmatprep.subr.bf16.mxu0 %v1795
        %1930 = vmatpush1.bf16.msra.mxu0 %v1794
        %1931 = vmatprep.subr.bf16.mxu0 %v1793
        %1932 = vmatpush1.bf16.msra.mxu0 %v1792
        %1933 = vmatprep.subr.bf16.mxu0 %v1791
        %1934 = vmatpush1.bf16.msra.mxu0 %v1790
        %1935 = vmatprep.subr.bf16.mxu0 %v1789
        %1936 = vmatpush1.bf16.msra.mxu0 %v1788
        %1937 = vmatprep.subr.bf16.mxu0 %v1787
        %1938 = vmatpush1.bf16.msra.mxu0 %v1786
        %1939 = vmatprep.subr.bf16.mxu0 %v1785
        %1940 = vmatpush1.bf16.msra.mxu0 %v1784
        %1941 = vmatprep.subr.bf16.mxu0 %v1783
        %1942 = vmatpush1.bf16.msra.mxu0 %v1782
        %1943 = vmatprep.subr.bf16.mxu0 %v1781
        %1944 = vmatpush1.bf16.msra.mxu0 %v1780
        %1945 = vmatprep.subr.bf16.mxu0 %v1811
        %1946 = vmatpush2.bf16.msra.mxu0 %v1810
        %1947 = vmatprep.subr.bf16.mxu0 %v1809
        %1948 = vmatpush2.bf16.msra.mxu0 %v1808
        %1949 = vmatprep.subr.bf16.mxu0 %v1807
        %1950 = vmatpush2.bf16.msra.mxu0 %v1806
        %1951 = vmatprep.subr.bf16.mxu0 %v1805
        %1952 = vmatpush2.bf16.msra.mxu0 %v1804
        %1953 = vmatprep.subr.bf16.mxu0 %v1803
        %1954 = vmatpush2.bf16.msra.mxu0 %v1802
        %1955 = vmatprep.subr.bf16.mxu0 %v1801
        %1956 = vmatpush2.bf16.msra.mxu0 %v1800
        %1957 = vmatprep.subr.bf16.mxu0 %v1799
        %1958 = vmatpush2.bf16.msra.mxu0 %v1798
        %1959 = vmatprep.subr.bf16.mxu0 %v1797
        %1960 = vmatpush2.bf16.msra.mxu0 %v1796
        %1961 = vmatprep.mubr.bf16.mxu0 %v427
        %1962 = vmatmul.mubr.bf16.gmra.mxu0 %v426
        %v1963 = vpop.f32.mrf.mxu0
        %v1964 = vadd.f32 %v1911, %v1963
        %v1965 = vpop.f32.mrf.mxu0
        %v1966 = vadd.f32 %v1913, %v1965
        %v1967 = vpop.f32.mrf.mxu0
        %v1968 = vadd.f32 %v1915, %v1967
        %v1969 = vpop.f32.mrf.mxu0
        %v1970 = vadd.f32 %v1917, %v1969
        %1971 = vmatprep.mubr.bf16.mxu0 %v431
        %1972 = vmatmul.mubr.bf16.gmra.mxu0 %v430
        %v1973 = vpop.f32.mrf.mxu0
        %v1974 = vadd.f32 %v1921, %v1973
        %v1975 = vpop.f32.mrf.mxu0
        %v1976 = vadd.f32 %v1923, %v1975
        %v1977 = vpop.f32.mrf.mxu0
        %v1978 = vadd.f32 %v1925, %v1977
        %v1979 = vpop.f32.mrf.mxu0
        %v1980 = vadd.f32 %v1927, %v1979
        %1981 = vdwg.mxu0
        %s1982 = scalar_lea.vmem %s284, 8 [#allocation7]
        %v1983 = vld [vmem:[%s1982] sm:$0xff]
        %v1984 = vld [vmem:[%s1982 + $0x10] sm:$0xff]
        %v1985 = vld [vmem:[%s1982 + $0x20] sm:$0xff]
        %v1986 = vld [vmem:[%s1982 + $0x30] sm:$0xff]
        %v1987 = vld [vmem:[%s1982 + $0x40] sm:$0xff]
        %v1988 = vld [vmem:[%s1982 + $0x50] sm:$0xff]
        %v1989 = vld [vmem:[%s1982 + $0x60] sm:$0xff]
        %v1990 = vld [vmem:[%s1982 + $0x70] sm:$0xff]
        %v1991 = vld [vmem:[%s1982 + $0x80] sm:$0xff]
        %v1992 = vld [vmem:[%s1982 + $0x90] sm:$0xff]
        %v1993 = vld [vmem:[%s1982 + $0xa0] sm:$0xff]
        %v1994 = vld [vmem:[%s1982 + $0xb0] sm:$0xff]
        %v1995 = vld [vmem:[%s1982 + $0xc0] sm:$0xff]
        %v1996 = vld [vmem:[%s1982 + $0xd0] sm:$0xff]
        %v1997 = vld [vmem:[%s1982 + $0xe0] sm:$0xff]
        %v1998 = vld [vmem:[%s1982 + $0xf0] sm:$0xff]
        %v1999 = vld [vmem:[%s1982 + $0x100] sm:$0xff]
        %v2000 = vld [vmem:[%s1982 + $0x110] sm:$0xff]
        %v2001 = vld [vmem:[%s1982 + $0x120] sm:$0xff]
        %v2002 = vld [vmem:[%s1982 + $0x130] sm:$0xff]
        %v2003 = vld [vmem:[%s1982 + $0x140] sm:$0xff]
        %v2004 = vld [vmem:[%s1982 + $0x150] sm:$0xff]
        %v2005 = vld [vmem:[%s1982 + $0x160] sm:$0xff]
        %v2006 = vld [vmem:[%s1982 + $0x170] sm:$0xff]
        %v2007 = vld [vmem:[%s1982 + $0x180] sm:$0xff]
        %v2008 = vld [vmem:[%s1982 + $0x190] sm:$0xff]
        %v2009 = vld [vmem:[%s1982 + $0x1a0] sm:$0xff]
        %v2010 = vld [vmem:[%s1982 + $0x1b0] sm:$0xff]
        %v2011 = vld [vmem:[%s1982 + $0x1c0] sm:$0xff]
        %v2012 = vld [vmem:[%s1982 + $0x1d0] sm:$0xff]
        %v2013 = vld [vmem:[%s1982 + $0x1e0] sm:$0xff]
        %v2014 = vld [vmem:[%s1982 + $0x1f0] sm:$0xff]
        %v2015 = vld [vmem:[%s1982 + $0x200] sm:$0xff]
        %v2016 = vld [vmem:[%s1982 + $0x210] sm:$0xff]
        %v2017 = vld [vmem:[%s1982 + $0x220] sm:$0xff]
        %v2018 = vld [vmem:[%s1982 + $0x230] sm:$0xff]
        %v2019 = vld [vmem:[%s1982 + $0x240] sm:$0xff]
        %v2020 = vld [vmem:[%s1982 + $0x250] sm:$0xff]
        %v2021 = vld [vmem:[%s1982 + $0x260] sm:$0xff]
        %v2022 = vld [vmem:[%s1982 + $0x270] sm:$0xff]
        %v2023 = vld [vmem:[%s1982 + $0x280] sm:$0xff]
        %v2024 = vld [vmem:[%s1982 + $0x290] sm:$0xff]
        %v2025 = vld [vmem:[%s1982 + $0x2a0] sm:$0xff]
        %v2026 = vld [vmem:[%s1982 + $0x2b0] sm:$0xff]
        %v2027 = vld [vmem:[%s1982 + $0x2c0] sm:$0xff]
        %v2028 = vld [vmem:[%s1982 + $0x2d0] sm:$0xff]
        %v2029 = vld [vmem:[%s1982 + $0x2e0] sm:$0xff]
        %v2030 = vld [vmem:[%s1982 + $0x2f0] sm:$0xff]
        %v2031 = vld [vmem:[%s1982 + $0x300] sm:$0xff]
        %v2032 = vld [vmem:[%s1982 + $0x310] sm:$0xff]
        %v2033 = vld [vmem:[%s1982 + $0x320] sm:$0xff]
        %v2034 = vld [vmem:[%s1982 + $0x330] sm:$0xff]
        %v2035 = vld [vmem:[%s1982 + $0x340] sm:$0xff]
        %v2036 = vld [vmem:[%s1982 + $0x350] sm:$0xff]
        %v2037 = vld [vmem:[%s1982 + $0x360] sm:$0xff]
        %v2038 = vld [vmem:[%s1982 + $0x370] sm:$0xff]
        %v2039 = vld [vmem:[%s1982 + $0x380] sm:$0xff]
        %v2040 = vld [vmem:[%s1982 + $0x390] sm:$0xff]
        %v2041 = vld [vmem:[%s1982 + $0x3a0] sm:$0xff]
        %v2042 = vld [vmem:[%s1982 + $0x3b0] sm:$0xff]
        %v2043 = vld [vmem:[%s1982 + $0x3c0] sm:$0xff]
        %v2044 = vld [vmem:[%s1982 + $0x3d0] sm:$0xff]
        %v2045 = vld [vmem:[%s1982 + $0x3e0] sm:$0xff]
        %v2046 = vld [vmem:[%s1982 + $0x3f0] sm:$0xff]
        %v2111 = vunpack.c.l.b16 %v1983
        %v2112 = vunpack.c.h.b16 %v1983
        %v2113 = vunpack.c.l.b16 %v1984
        %v2114 = vunpack.c.h.b16 %v1984
        %v2115 = vunpack.c.l.b16 %v1985
        %v2116 = vunpack.c.h.b16 %v1985
        %v2117 = vunpack.c.l.b16 %v1986
        %v2118 = vunpack.c.h.b16 %v1986
        %v2119 = vunpack.c.l.b16 %v1987
        %v2120 = vunpack.c.h.b16 %v1987
        %v2121 = vunpack.c.l.b16 %v1988
        %v2122 = vunpack.c.h.b16 %v1988
        %v2123 = vunpack.c.l.b16 %v1989
        %v2124 = vunpack.c.h.b16 %v1989
        %v2125 = vunpack.c.l.b16 %v1990
        %v2126 = vunpack.c.h.b16 %v1990
        %v2127 = vunpack.c.l.b16 %v1991
        %v2128 = vunpack.c.h.b16 %v1991
        %v2129 = vunpack.c.l.b16 %v1992
        %v2130 = vunpack.c.h.b16 %v1992
        %v2131 = vunpack.c.l.b16 %v1993
        %v2132 = vunpack.c.h.b16 %v1993
        %v2133 = vunpack.c.l.b16 %v1994
        %v2134 = vunpack.c.h.b16 %v1994
        %v2135 = vunpack.c.l.b16 %v1995
        %v2136 = vunpack.c.h.b16 %v1995
        %v2137 = vunpack.c.l.b16 %v1996
        %v2138 = vunpack.c.h.b16 %v1996
        %v2139 = vunpack.c.l.b16 %v1997
        %v2140 = vunpack.c.h.b16 %v1997
        %v2141 = vunpack.c.l.b16 %v1998
        %v2142 = vunpack.c.h.b16 %v1998
        %v2143 = vunpack.c.l.b16 %v1999
        %v2144 = vunpack.c.h.b16 %v1999
        %v2145 = vunpack.c.l.b16 %v2000
        %v2146 = vunpack.c.h.b16 %v2000
        %v2147 = vunpack.c.l.b16 %v2001
        %v2148 = vunpack.c.h.b16 %v2001
        %v2149 = vunpack.c.l.b16 %v2002
        %v2150 = vunpack.c.h.b16 %v2002
        %v2151 = vunpack.c.l.b16 %v2003
        %v2152 = vunpack.c.h.b16 %v2003
        %v2153 = vunpack.c.l.b16 %v2004
        %v2154 = vunpack.c.h.b16 %v2004
        %v2155 = vunpack.c.l.b16 %v2005
        %v2156 = vunpack.c.h.b16 %v2005
        %v2157 = vunpack.c.l.b16 %v2006
        %v2158 = vunpack.c.h.b16 %v2006
        %v2159 = vunpack.c.l.b16 %v2007
        %v2160 = vunpack.c.h.b16 %v2007
        %v2161 = vunpack.c.l.b16 %v2008
        %v2162 = vunpack.c.h.b16 %v2008
        %v2163 = vunpack.c.l.b16 %v2009
        %v2164 = vunpack.c.h.b16 %v2009
        %v2165 = vunpack.c.l.b16 %v2010
        %v2166 = vunpack.c.h.b16 %v2010
        %v2167 = vunpack.c.l.b16 %v2011
        %v2168 = vunpack.c.h.b16 %v2011
        %v2169 = vunpack.c.l.b16 %v2012
        %v2170 = vunpack.c.h.b16 %v2012
        %v2171 = vunpack.c.l.b16 %v2013
        %v2172 = vunpack.c.h.b16 %v2013
        %v2173 = vunpack.c.l.b16 %v2014
        %v2174 = vunpack.c.h.b16 %v2014
        %v2175 = vunpack.c.l.b16 %v2015
        %v2176 = vunpack.c.h.b16 %v2015
        %v2177 = vunpack.c.l.b16 %v2016
        %v2178 = vunpack.c.h.b16 %v2016
        %v2179 = vunpack.c.l.b16 %v2017
        %v2180 = vunpack.c.h.b16 %v2017
        %v2181 = vunpack.c.l.b16 %v2018
        %v2182 = vunpack.c.h.b16 %v2018
        %v2183 = vunpack.c.l.b16 %v2019
        %v2184 = vunpack.c.h.b16 %v2019
        %v2185 = vunpack.c.l.b16 %v2020
        %v2186 = vunpack.c.h.b16 %v2020
        %v2187 = vunpack.c.l.b16 %v2021
        %v2188 = vunpack.c.h.b16 %v2021
        %v2189 = vunpack.c.l.b16 %v2022
        %v2190 = vunpack.c.h.b16 %v2022
        %v2191 = vunpack.c.l.b16 %v2023
        %v2192 = vunpack.c.h.b16 %v2023
        %v2193 = vunpack.c.l.b16 %v2024
        %v2194 = vunpack.c.h.b16 %v2024
        %v2195 = vunpack.c.l.b16 %v2025
        %v2196 = vunpack.c.h.b16 %v2025
        %v2197 = vunpack.c.l.b16 %v2026
        %v2198 = vunpack.c.h.b16 %v2026
        %v2199 = vunpack.c.l.b16 %v2027
        %v2200 = vunpack.c.h.b16 %v2027
        %v2201 = vunpack.c.l.b16 %v2028
        %v2202 = vunpack.c.h.b16 %v2028
        %v2203 = vunpack.c.l.b16 %v2029
        %v2204 = vunpack.c.h.b16 %v2029
        %v2205 = vunpack.c.l.b16 %v2030
        %v2206 = vunpack.c.h.b16 %v2030
        %v2207 = vunpack.c.l.b16 %v2031
        %v2208 = vunpack.c.h.b16 %v2031
        %v2209 = vunpack.c.l.b16 %v2032
        %v2210 = vunpack.c.h.b16 %v2032
        %v2211 = vunpack.c.l.b16 %v2033
        %v2212 = vunpack.c.h.b16 %v2033
        %v2213 = vunpack.c.l.b16 %v2034
        %v2214 = vunpack.c.h.b16 %v2034
        %v2215 = vunpack.c.l.b16 %v2035
        %v2216 = vunpack.c.h.b16 %v2035
        %v2217 = vunpack.c.l.b16 %v2036
        %v2218 = vunpack.c.h.b16 %v2036
        %v2219 = vunpack.c.l.b16 %v2037
        %v2220 = vunpack.c.h.b16 %v2037
        %v2221 = vunpack.c.l.b16 %v2038
        %v2222 = vunpack.c.h.b16 %v2038
        %v2223 = vunpack.c.l.b16 %v2039
        %v2224 = vunpack.c.h.b16 %v2039
        %v2225 = vunpack.c.l.b16 %v2040
        %v2226 = vunpack.c.h.b16 %v2040
        %v2227 = vunpack.c.l.b16 %v2041
        %v2228 = vunpack.c.h.b16 %v2041
        %v2229 = vunpack.c.l.b16 %v2042
        %v2230 = vunpack.c.h.b16 %v2042
        %v2231 = vunpack.c.l.b16 %v2043
        %v2232 = vunpack.c.h.b16 %v2043
        %v2233 = vunpack.c.l.b16 %v2044
        %v2234 = vunpack.c.h.b16 %v2044
        %v2235 = vunpack.c.l.b16 %v2045
        %v2236 = vunpack.c.h.b16 %v2045
        %v2237 = vunpack.c.l.b16 %v2046
        %v2238 = vunpack.c.h.b16 %v2046
        %v2239 = vpack.c.b16 %v2113, %v2111
        %v2240 = vpack.c.b16 %v2114, %v2112
        %v2241 = vpack.c.b16 %v2117, %v2115
        %v2242 = vpack.c.b16 %v2118, %v2116
        %v2243 = vpack.c.b16 %v2121, %v2119
        %v2244 = vpack.c.b16 %v2122, %v2120
        %v2245 = vpack.c.b16 %v2125, %v2123
        %v2246 = vpack.c.b16 %v2126, %v2124
        %v2247 = vpack.c.b16 %v2129, %v2127
        %v2248 = vpack.c.b16 %v2130, %v2128
        %v2249 = vpack.c.b16 %v2133, %v2131
        %v2250 = vpack.c.b16 %v2134, %v2132
        %v2251 = vpack.c.b16 %v2137, %v2135
        %v2252 = vpack.c.b16 %v2138, %v2136
        %v2253 = vpack.c.b16 %v2141, %v2139
        %v2254 = vpack.c.b16 %v2142, %v2140
        %v2255 = vpack.c.b16 %v2145, %v2143
        %v2256 = vpack.c.b16 %v2146, %v2144
        %v2257 = vpack.c.b16 %v2149, %v2147
        %v2258 = vpack.c.b16 %v2150, %v2148
        %v2259 = vpack.c.b16 %v2153, %v2151
        %v2260 = vpack.c.b16 %v2154, %v2152
        %v2261 = vpack.c.b16 %v2157, %v2155
        %v2262 = vpack.c.b16 %v2158, %v2156
        %v2263 = vpack.c.b16 %v2161, %v2159
        %v2264 = vpack.c.b16 %v2162, %v2160
        %v2265 = vpack.c.b16 %v2165, %v2163
        %v2266 = vpack.c.b16 %v2166, %v2164
        %v2267 = vpack.c.b16 %v2169, %v2167
        %v2268 = vpack.c.b16 %v2170, %v2168
        %v2269 = vpack.c.b16 %v2173, %v2171
        %v2270 = vpack.c.b16 %v2174, %v2172
        %v2271 = vpack.c.b16 %v2177, %v2175
        %v2272 = vpack.c.b16 %v2178, %v2176
        %v2273 = vpack.c.b16 %v2181, %v2179
        %v2274 = vpack.c.b16 %v2182, %v2180
        %v2275 = vpack.c.b16 %v2185, %v2183
        %v2276 = vpack.c.b16 %v2186, %v2184
        %v2277 = vpack.c.b16 %v2189, %v2187
        %v2278 = vpack.c.b16 %v2190, %v2188
        %v2279 = vpack.c.b16 %v2193, %v2191
        %v2280 = vpack.c.b16 %v2194, %v2192
        %v2281 = vpack.c.b16 %v2197, %v2195
        %v2282 = vpack.c.b16 %v2198, %v2196
        %v2283 = vpack.c.b16 %v2201, %v2199
        %v2284 = vpack.c.b16 %v2202, %v2200
        %v2285 = vpack.c.b16 %v2205, %v2203
        %v2286 = vpack.c.b16 %v2206, %v2204
        %v2287 = vpack.c.b16 %v2209, %v2207
        %v2288 = vpack.c.b16 %v2210, %v2208
        %v2289 = vpack.c.b16 %v2213, %v2211
        %v2290 = vpack.c.b16 %v2214, %v2212
        %v2291 = vpack.c.b16 %v2217, %v2215
        %v2292 = vpack.c.b16 %v2218, %v2216
        %v2293 = vpack.c.b16 %v2221, %v2219
        %v2294 = vpack.c.b16 %v2222, %v2220
        %v2295 = vpack.c.b16 %v2225, %v2223
        %v2296 = vpack.c.b16 %v2226, %v2224
        %v2297 = vpack.c.b16 %v2229, %v2227
        %v2298 = vpack.c.b16 %v2230, %v2228
        %v2299 = vpack.c.b16 %v2233, %v2231
        %v2300 = vpack.c.b16 %v2234, %v2232
        %v2301 = vpack.c.b16 %v2237, %v2235
        %v2302 = vpack.c.b16 %v2238, %v2236
        %2367 = vmatprep.subr.bf16.mxu0 %v2254
        %2368 = vmatpush1.bf16.msra.mxu0 %v2253
        %2369 = vmatprep.subr.bf16.mxu0 %v2252
        %2370 = vmatpush1.bf16.msra.mxu0 %v2251
        %2371 = vmatprep.subr.bf16.mxu0 %v2250
        %2372 = vmatpush1.bf16.msra.mxu0 %v2249
        %2373 = vmatprep.subr.bf16.mxu0 %v2248
        %2374 = vmatpush1.bf16.msra.mxu0 %v2247
        %2375 = vmatprep.subr.bf16.mxu0 %v2246
        %2376 = vmatpush1.bf16.msra.mxu0 %v2245
        %2377 = vmatprep.subr.bf16.mxu0 %v2244
        %2378 = vmatpush1.bf16.msra.mxu0 %v2243
        %2379 = vmatprep.subr.bf16.mxu0 %v2242
        %2380 = vmatpush1.bf16.msra.mxu0 %v2241
        %2381 = vmatprep.subr.bf16.mxu0 %v2240
        %2382 = vmatpush1.bf16.msra.mxu0 %v2239
        %2383 = vmatprep.subr.bf16.mxu0 %v2270
        %2384 = vmatpush2.bf16.msra.mxu0 %v2269
        %2385 = vmatprep.subr.bf16.mxu0 %v2268
        %2386 = vmatpush2.bf16.msra.mxu0 %v2267
        %2387 = vmatprep.subr.bf16.mxu0 %v2266
        %2388 = vmatpush2.bf16.msra.mxu0 %v2265
        %2389 = vmatprep.subr.bf16.mxu0 %v2264
        %2390 = vmatpush2.bf16.msra.mxu0 %v2263
        %2391 = vmatprep.subr.bf16.mxu0 %v2262
        %2392 = vmatpush2.bf16.msra.mxu0 %v2261
        %2393 = vmatprep.subr.bf16.mxu0 %v2260
        %2394 = vmatpush2.bf16.msra.mxu0 %v2259
        %2395 = vmatprep.subr.bf16.mxu0 %v2258
        %2396 = vmatpush2.bf16.msra.mxu0 %v2257
        %2397 = vmatprep.subr.bf16.mxu0 %v2256
        %2398 = vmatpush2.bf16.msra.mxu0 %v2255
        %2399 = vmatprep.mubr.bf16.mxu0 %v425
        %2400 = vmatmul.mubr.bf16.gmra.mxu0 %v424
        %v2401 = vpop.f32.mrf.mxu0
        %v2402 = vadd.f32 0.0, %v2401
        %v2403 = vpop.f32.mrf.mxu0
        %v2404 = vadd.f32 0.0, %v2403
        %v2405 = vpop.f32.mrf.mxu0
        %v2406 = vadd.f32 0.0, %v2405
        %v2407 = vpop.f32.mrf.mxu0
        %v2408 = vadd.f32 0.0, %v2407
        %2409 = vmatprep.mubr.bf16.mxu0 %v429
        %2410 = vmatmul.mubr.bf16.gmra.mxu0 %v428
        %v2411 = vpop.f32.mrf.mxu0
        %v2412 = vadd.f32 0.0, %v2411
        %v2413 = vpop.f32.mrf.mxu0
        %v2414 = vadd.f32 0.0, %v2413
        %v2415 = vpop.f32.mrf.mxu0
        %v2416 = vadd.f32 0.0, %v2415
        %v2417 = vpop.f32.mrf.mxu0
        %v2418 = vadd.f32 0.0, %v2417
        %2419 = vdwg.mxu0
        %2420 = vmatprep.subr.bf16.mxu0 %v2286
        %2421 = vmatpush1.bf16.msra.mxu0 %v2285
        %2422 = vmatprep.subr.bf16.mxu0 %v2284
        %2423 = vmatpush1.bf16.msra.mxu0 %v2283
        %2424 = vmatprep.subr.bf16.mxu0 %v2282
        %2425 = vmatpush1.bf16.msra.mxu0 %v2281
        %2426 = vmatprep.subr.bf16.mxu0 %v2280
        %2427 = vmatpush1.bf16.msra.mxu0 %v2279
        %2428 = vmatprep.subr.bf16.mxu0 %v2278
        %2429 = vmatpush1.bf16.msra.mxu0 %v2277
        %2430 = vmatprep.subr.bf16.mxu0 %v2276
        %2431 = vmatpush1.bf16.msra.mxu0 %v2275
        %2432 = vmatprep.subr.bf16.mxu0 %v2274
        %2433 = vmatpush1.bf16.msra.mxu0 %v2273
        %2434 = vmatprep.subr.bf16.mxu0 %v2272
        %2435 = vmatpush1.bf16.msra.mxu0 %v2271
        %2436 = vmatprep.subr.bf16.mxu0 %v2302
        %2437 = vmatpush2.bf16.msra.mxu0 %v2301
        %2438 = vmatprep.subr.bf16.mxu0 %v2300
        %2439 = vmatpush2.bf16.msra.mxu0 %v2299
        %2440 = vmatprep.subr.bf16.mxu0 %v2298
        %2441 = vmatpush2.bf16.msra.mxu0 %v2297
        %2442 = vmatprep.subr.bf16.mxu0 %v2296
        %2443 = vmatpush2.bf16.msra.mxu0 %v2295
        %2444 = vmatprep.subr.bf16.mxu0 %v2294
        %2445 = vmatpush2.bf16.msra.mxu0 %v2293
        %2446 = vmatprep.subr.bf16.mxu0 %v2292
        %2447 = vmatpush2.bf16.msra.mxu0 %v2291
        %2448 = vmatprep.subr.bf16.mxu0 %v2290
        %2449 = vmatpush2.bf16.msra.mxu0 %v2289
        %2450 = vmatprep.subr.bf16.mxu0 %v2288
        %2451 = vmatpush2.bf16.msra.mxu0 %v2287
        %2452 = vmatprep.mubr.bf16.mxu0 %v427
        %2453 = vmatmul.mubr.bf16.gmra.mxu0 %v426
        %v2454 = vpop.f32.mrf.mxu0
        %v2455 = vadd.f32 %v2402, %v2454
        %v2456 = vpop.f32.mrf.mxu0
        %v2457 = vadd.f32 %v2404, %v2456
        %v2458 = vpop.f32.mrf.mxu0
        %v2459 = vadd.f32 %v2406, %v2458
        %v2460 = vpop.f32.mrf.mxu0
        %v2461 = vadd.f32 %v2408, %v2460
        %2462 = vmatprep.mubr.bf16.mxu0 %v431
        %2463 = vmatmul.mubr.bf16.gmra.mxu0 %v430
        %v2464 = vpop.f32.mrf.mxu0
        %v2465 = vadd.f32 %v2412, %v2464
        %v2466 = vpop.f32.mrf.mxu0
        %v2467 = vadd.f32 %v2414, %v2466
        %v2468 = vpop.f32.mrf.mxu0
        %v2469 = vadd.f32 %v2416, %v2468
        %v2470 = vpop.f32.mrf.mxu0
        %v2471 = vadd.f32 %v2418, %v2470
        %2472 = vdwg.mxu0
        %v2473 = vxor.u32 %v1964, 2147483648
        %v2474 = vxor.u32 %v1966, 2147483648
        %v2475 = vxor.u32 %v1968, 2147483648
        %v2476 = vxor.u32 %v1970, 2147483648
        %v2477 = vxor.u32 %v1974, 2147483648
        %v2478 = vxor.u32 %v1976, 2147483648
        %v2479 = vxor.u32 %v1978, 2147483648
        %v2480 = vxor.u32 %v1980, 2147483648
        %v2481 = vmul.f32 %v2473, 1.442695
        %v2482 = vpow.pop %v2481
        %v2483 = vmul.f32 %v2474, 1.442695
        %v2484 = vpow.pop %v2483
        %v2485 = vmul.f32 %v2475, 1.442695
        %v2486 = vpow.pop %v2485
        %v2487 = vmul.f32 %v2476, 1.442695
        %v2488 = vpow.pop %v2487
        %v2489 = vmul.f32 %v2477, 1.442695
        %v2490 = vpow.pop %v2489
        %v2491 = vmul.f32 %v2478, 1.442695
        %v2492 = vpow.pop %v2491
        %v2493 = vmul.f32 %v2479, 1.442695
        %v2494 = vpow.pop %v2493
        %v2495 = vmul.f32 %v2480, 1.442695
        %v2496 = vpow.pop %v2495
        %v2497 = vadd.f32 %v2482, 1.0
        %v2498 = vadd.f32 %v2484, 1.0
        %v2499 = vadd.f32 %v2486, 1.0
        %v2500 = vadd.f32 %v2488, 1.0
        %v2501 = vadd.f32 %v2490, 1.0
        %v2502 = vadd.f32 %v2492, 1.0
        %v2503 = vadd.f32 %v2494, 1.0
        %v2504 = vadd.f32 %v2496, 1.0
        %v2505 = vrcp.pop %v2497
        %v2506 = vmul.f32 1.0, %v2505
        %v2507 = vrcp.pop %v2498
        %v2508 = vmul.f32 1.0, %v2507
        %v2509 = vrcp.pop %v2499
        %v2510 = vmul.f32 1.0, %v2509
        %v2511 = vrcp.pop %v2500
        %v2512 = vmul.f32 1.0, %v2511
        %v2513 = vrcp.pop %v2501
        %v2514 = vmul.f32 1.0, %v2513
        %v2515 = vrcp.pop %v2502
        %v2516 = vmul.f32 1.0, %v2515
        %v2517 = vrcp.pop %v2503
        %v2518 = vmul.f32 1.0, %v2517
        %v2519 = vrcp.pop %v2504
        %v2520 = vmul.f32 1.0, %v2519
        %v2521 = vmul.f32 %v1964, %v2506
        %v2522 = vmul.f32 %v1966, %v2508
        %v2523 = vmul.f32 %v1968, %v2510
        %v2524 = vmul.f32 %v1970, %v2512
        %v2525 = vmul.f32 %v1974, %v2514
        %v2526 = vmul.f32 %v1976, %v2516
        %v2527 = vmul.f32 %v1978, %v2518
        %v2528 = vmul.f32 %v1980, %v2520
        %v2529 = vmul.f32 %v2521, %v2455
        %v2530 = vmul.f32 %v2522, %v2457
        %v2531 = vmul.f32 %v2523, %v2459
        %v2532 = vmul.f32 %v2524, %v2461
        %v2533 = vmul.f32 %v2525, %v2465
        %v2534 = vmul.f32 %v2526, %v2467
        %v2535 = vmul.f32 %v2527, %v2469
        %v2536 = vmul.f32 %v2528, %v2471
        %v2537 = vpack.c.bf16 %v2531, %v2529
        %v2538 = vpack.c.bf16 %v2532, %v2530
        %v2539 = vpack.c.bf16 %v2535, %v2533
        %v2540 = vpack.c.bf16 %v2536, %v2534
        %s2541 = smul.u32 32, 4
        %s2542 = smul.addr %s2541, 4
        %s2543 = scalar_lea.vmem %s293, %s2542 [#allocation8]
        %v2544 = vld [vmem:[%s2543] sm:$0xff]
        %v2545 = vld [vmem:[%s2543 + $0x8] sm:$0xff]
        %v2546 = vld [vmem:[%s2543 + $0x10] sm:$0xff]
        %v2547 = vld [vmem:[%s2543 + $0x18] sm:$0xff]
        %v2548 = vld [vmem:[%s2543 + $0x20] sm:$0xff]
        %v2549 = vld [vmem:[%s2543 + $0x28] sm:$0xff]
        %v2550 = vld [vmem:[%s2543 + $0x30] sm:$0xff]
        %v2551 = vld [vmem:[%s2543 + $0x38] sm:$0xff]
        %v2552 = vld [vmem:[%s2543 + $0x40] sm:$0xff]
        %v2553 = vld [vmem:[%s2543 + $0x48] sm:$0xff]
        %v2554 = vld [vmem:[%s2543 + $0x50] sm:$0xff]
        %v2555 = vld [vmem:[%s2543 + $0x58] sm:$0xff]
        %v2556 = vld [vmem:[%s2543 + $0x60] sm:$0xff]
        %v2557 = vld [vmem:[%s2543 + $0x68] sm:$0xff]
        %v2558 = vld [vmem:[%s2543 + $0x70] sm:$0xff]
        %v2559 = vld [vmem:[%s2543 + $0x78] sm:$0xff]
        %v2560 = vld [vmem:[%s2543 + $0x80] sm:$0xff]
        %v2561 = vld [vmem:[%s2543 + $0x88] sm:$0xff]
        %v2562 = vld [vmem:[%s2543 + $0x90] sm:$0xff]
        %v2563 = vld [vmem:[%s2543 + $0x98] sm:$0xff]
        %v2564 = vld [vmem:[%s2543 + $0xa0] sm:$0xff]
        %v2565 = vld [vmem:[%s2543 + $0xa8] sm:$0xff]
        %v2566 = vld [vmem:[%s2543 + $0xb0] sm:$0xff]
        %v2567 = vld [vmem:[%s2543 + $0xb8] sm:$0xff]
        %v2568 = vld [vmem:[%s2543 + $0xc0] sm:$0xff]
        %v2569 = vld [vmem:[%s2543 + $0xc8] sm:$0xff]
        %v2570 = vld [vmem:[%s2543 + $0xd0] sm:$0xff]
        %v2571 = vld [vmem:[%s2543 + $0xd8] sm:$0xff]
        %v2572 = vld [vmem:[%s2543 + $0xe0] sm:$0xff]
        %v2573 = vld [vmem:[%s2543 + $0xe8] sm:$0xff]
        %v2574 = vld [vmem:[%s2543 + $0xf0] sm:$0xff]
        %v2575 = vld [vmem:[%s2543 + $0xf8] sm:$0xff]
        %v2576 = vld [vmem:[%s2543 + $0x100] sm:$0xff]
        %v2577 = vld [vmem:[%s2543 + $0x108] sm:$0xff]
        %v2578 = vld [vmem:[%s2543 + $0x110] sm:$0xff]
        %v2579 = vld [vmem:[%s2543 + $0x118] sm:$0xff]
        %v2580 = vld [vmem:[%s2543 + $0x120] sm:$0xff]
        %v2581 = vld [vmem:[%s2543 + $0x128] sm:$0xff]
        %v2582 = vld [vmem:[%s2543 + $0x130] sm:$0xff]
        %v2583 = vld [vmem:[%s2543 + $0x138] sm:$0xff]
        %v2584 = vld [vmem:[%s2543 + $0x140] sm:$0xff]
        %v2585 = vld [vmem:[%s2543 + $0x148] sm:$0xff]
        %v2586 = vld [vmem:[%s2543 + $0x150] sm:$0xff]
        %v2587 = vld [vmem:[%s2543 + $0x158] sm:$0xff]
        %v2588 = vld [vmem:[%s2543 + $0x160] sm:$0xff]
        %v2589 = vld [vmem:[%s2543 + $0x168] sm:$0xff]
        %v2590 = vld [vmem:[%s2543 + $0x170] sm:$0xff]
        %v2591 = vld [vmem:[%s2543 + $0x178] sm:$0xff]
        %v2592 = vld [vmem:[%s2543 + $0x180] sm:$0xff]
        %v2593 = vld [vmem:[%s2543 + $0x188] sm:$0xff]
        %v2594 = vld [vmem:[%s2543 + $0x190] sm:$0xff]
        %v2595 = vld [vmem:[%s2543 + $0x198] sm:$0xff]
        %v2596 = vld [vmem:[%s2543 + $0x1a0] sm:$0xff]
        %v2597 = vld [vmem:[%s2543 + $0x1a8] sm:$0xff]
        %v2598 = vld [vmem:[%s2543 + $0x1b0] sm:$0xff]
        %v2599 = vld [vmem:[%s2543 + $0x1b8] sm:$0xff]
        %v2600 = vld [vmem:[%s2543 + $0x1c0] sm:$0xff]
        %v2601 = vld [vmem:[%s2543 + $0x1c8] sm:$0xff]
        %v2602 = vld [vmem:[%s2543 + $0x1d0] sm:$0xff]
        %v2603 = vld [vmem:[%s2543 + $0x1d8] sm:$0xff]
        %v2604 = vld [vmem:[%s2543 + $0x1e0] sm:$0xff]
        %v2605 = vld [vmem:[%s2543 + $0x1e8] sm:$0xff]
        %v2606 = vld [vmem:[%s2543 + $0x1f0] sm:$0xff]
        %v2607 = vld [vmem:[%s2543 + $0x1f8] sm:$0xff]
        %v2672 = vunpack.c.l.b16 %v2544
        %v2673 = vunpack.c.h.b16 %v2544
        %v2674 = vunpack.c.l.b16 %v2545
        %v2675 = vunpack.c.h.b16 %v2545
        %v2676 = vunpack.c.l.b16 %v2546
        %v2677 = vunpack.c.h.b16 %v2546
        %v2678 = vunpack.c.l.b16 %v2547
        %v2679 = vunpack.c.h.b16 %v2547
        %v2680 = vunpack.c.l.b16 %v2548
        %v2681 = vunpack.c.h.b16 %v2548
        %v2682 = vunpack.c.l.b16 %v2549
        %v2683 = vunpack.c.h.b16 %v2549
        %v2684 = vunpack.c.l.b16 %v2550
        %v2685 = vunpack.c.h.b16 %v2550
        %v2686 = vunpack.c.l.b16 %v2551
        %v2687 = vunpack.c.h.b16 %v2551
        %v2688 = vunpack.c.l.b16 %v2552
        %v2689 = vunpack.c.h.b16 %v2552
        %v2690 = vunpack.c.l.b16 %v2553
        %v2691 = vunpack.c.h.b16 %v2553
        %v2692 = vunpack.c.l.b16 %v2554
        %v2693 = vunpack.c.h.b16 %v2554
        %v2694 = vunpack.c.l.b16 %v2555
        %v2695 = vunpack.c.h.b16 %v2555
        %v2696 = vunpack.c.l.b16 %v2556
        %v2697 = vunpack.c.h.b16 %v2556
        %v2698 = vunpack.c.l.b16 %v2557
        %v2699 = vunpack.c.h.b16 %v2557
        %v2700 = vunpack.c.l.b16 %v2558
        %v2701 = vunpack.c.h.b16 %v2558
        %v2702 = vunpack.c.l.b16 %v2559
        %v2703 = vunpack.c.h.b16 %v2559
        %v2704 = vunpack.c.l.b16 %v2560
        %v2705 = vunpack.c.h.b16 %v2560
        %v2706 = vunpack.c.l.b16 %v2561
        %v2707 = vunpack.c.h.b16 %v2561
        %v2708 = vunpack.c.l.b16 %v2562
        %v2709 = vunpack.c.h.b16 %v2562
        %v2710 = vunpack.c.l.b16 %v2563
        %v2711 = vunpack.c.h.b16 %v2563
        %v2712 = vunpack.c.l.b16 %v2564
        %v2713 = vunpack.c.h.b16 %v2564
        %v2714 = vunpack.c.l.b16 %v2565
        %v2715 = vunpack.c.h.b16 %v2565
        %v2716 = vunpack.c.l.b16 %v2566
        %v2717 = vunpack.c.h.b16 %v2566
        %v2718 = vunpack.c.l.b16 %v2567
        %v2719 = vunpack.c.h.b16 %v2567
        %v2720 = vunpack.c.l.b16 %v2568
        %v2721 = vunpack.c.h.b16 %v2568
        %v2722 = vunpack.c.l.b16 %v2569
        %v2723 = vunpack.c.h.b16 %v2569
        %v2724 = vunpack.c.l.b16 %v2570
        %v2725 = vunpack.c.h.b16 %v2570
        %v2726 = vunpack.c.l.b16 %v2571
        %v2727 = vunpack.c.h.b16 %v2571
        %v2728 = vunpack.c.l.b16 %v2572
        %v2729 = vunpack.c.h.b16 %v2572
        %v2730 = vunpack.c.l.b16 %v2573
        %v2731 = vunpack.c.h.b16 %v2573
        %v2732 = vunpack.c.l.b16 %v2574
        %v2733 = vunpack.c.h.b16 %v2574
        %v2734 = vunpack.c.l.b16 %v2575
        %v2735 = vunpack.c.h.b16 %v2575
        %v2736 = vunpack.c.l.b16 %v2576
        %v2737 = vunpack.c.h.b16 %v2576
        %v2738 = vunpack.c.l.b16 %v2577
        %v2739 = vunpack.c.h.b16 %v2577
        %v2740 = vunpack.c.l.b16 %v2578
        %v2741 = vunpack.c.h.b16 %v2578
        %v2742 = vunpack.c.l.b16 %v2579
        %v2743 = vunpack.c.h.b16 %v2579
        %v2744 = vunpack.c.l.b16 %v2580
        %v2745 = vunpack.c.h.b16 %v2580
        %v2746 = vunpack.c.l.b16 %v2581
        %v2747 = vunpack.c.h.b16 %v2581
        %v2748 = vunpack.c.l.b16 %v2582
        %v2749 = vunpack.c.h.b16 %v2582
        %v2750 = vunpack.c.l.b16 %v2583
        %v2751 = vunpack.c.h.b16 %v2583
        %v2752 = vunpack.c.l.b16 %v2584
        %v2753 = vunpack.c.h.b16 %v2584
        %v2754 = vunpack.c.l.b16 %v2585
        %v2755 = vunpack.c.h.b16 %v2585
        %v2756 = vunpack.c.l.b16 %v2586
        %v2757 = vunpack.c.h.b16 %v2586
        %v2758 = vunpack.c.l.b16 %v2587
        %v2759 = vunpack.c.h.b16 %v2587
        %v2760 = vunpack.c.l.b16 %v2588
        %v2761 = vunpack.c.h.b16 %v2588
        %v2762 = vunpack.c.l.b16 %v2589
        %v2763 = vunpack.c.h.b16 %v2589
        %v2764 = vunpack.c.l.b16 %v2590
        %v2765 = vunpack.c.h.b16 %v2590
        %v2766 = vunpack.c.l.b16 %v2591
        %v2767 = vunpack.c.h.b16 %v2591
        %v2768 = vunpack.c.l.b16 %v2592
        %v2769 = vunpack.c.h.b16 %v2592
        %v2770 = vunpack.c.l.b16 %v2593
        %v2771 = vunpack.c.h.b16 %v2593
        %v2772 = vunpack.c.l.b16 %v2594
        %v2773 = vunpack.c.h.b16 %v2594
        %v2774 = vunpack.c.l.b16 %v2595
        %v2775 = vunpack.c.h.b16 %v2595
        %v2776 = vunpack.c.l.b16 %v2596
        %v2777 = vunpack.c.h.b16 %v2596
        %v2778 = vunpack.c.l.b16 %v2597
        %v2779 = vunpack.c.h.b16 %v2597
        %v2780 = vunpack.c.l.b16 %v2598
        %v2781 = vunpack.c.h.b16 %v2598
        %v2782 = vunpack.c.l.b16 %v2599
        %v2783 = vunpack.c.h.b16 %v2599
        %v2784 = vunpack.c.l.b16 %v2600
        %v2785 = vunpack.c.h.b16 %v2600
        %v2786 = vunpack.c.l.b16 %v2601
        %v2787 = vunpack.c.h.b16 %v2601
        %v2788 = vunpack.c.l.b16 %v2602
        %v2789 = vunpack.c.h.b16 %v2602
        %v2790 = vunpack.c.l.b16 %v2603
        %v2791 = vunpack.c.h.b16 %v2603
        %v2792 = vunpack.c.l.b16 %v2604
        %v2793 = vunpack.c.h.b16 %v2604
        %v2794 = vunpack.c.l.b16 %v2605
        %v2795 = vunpack.c.h.b16 %v2605
        %v2796 = vunpack.c.l.b16 %v2606
        %v2797 = vunpack.c.h.b16 %v2606
        %v2798 = vunpack.c.l.b16 %v2607
        %v2799 = vunpack.c.h.b16 %v2607
        %v2800 = vpack.c.b16 %v2676, %v2672
        %v2801 = vpack.c.b16 %v2677, %v2673
        %v2802 = vpack.c.b16 %v2678, %v2674
        %v2803 = vpack.c.b16 %v2679, %v2675
        %v2804 = vpack.c.b16 %v2684, %v2680
        %v2805 = vpack.c.b16 %v2685, %v2681
        %v2806 = vpack.c.b16 %v2686, %v2682
        %v2807 = vpack.c.b16 %v2687, %v2683
        %v2808 = vpack.c.b16 %v2692, %v2688
        %v2809 = vpack.c.b16 %v2693, %v2689
        %v2810 = vpack.c.b16 %v2694, %v2690
        %v2811 = vpack.c.b16 %v2695, %v2691
        %v2812 = vpack.c.b16 %v2700, %v2696
        %v2813 = vpack.c.b16 %v2701, %v2697
        %v2814 = vpack.c.b16 %v2702, %v2698
        %v2815 = vpack.c.b16 %v2703, %v2699
        %v2816 = vpack.c.b16 %v2708, %v2704
        %v2817 = vpack.c.b16 %v2709, %v2705
        %v2818 = vpack.c.b16 %v2710, %v2706
        %v2819 = vpack.c.b16 %v2711, %v2707
        %v2820 = vpack.c.b16 %v2716, %v2712
        %v2821 = vpack.c.b16 %v2717, %v2713
        %v2822 = vpack.c.b16 %v2718, %v2714
        %v2823 = vpack.c.b16 %v2719, %v2715
        %v2824 = vpack.c.b16 %v2724, %v2720
        %v2825 = vpack.c.b16 %v2725, %v2721
        %v2826 = vpack.c.b16 %v2726, %v2722
        %v2827 = vpack.c.b16 %v2727, %v2723
        %v2828 = vpack.c.b16 %v2732, %v2728
        %v2829 = vpack.c.b16 %v2733, %v2729
        %v2830 = vpack.c.b16 %v2734, %v2730
        %v2831 = vpack.c.b16 %v2735, %v2731
        %v2832 = vpack.c.b16 %v2740, %v2736
        %v2833 = vpack.c.b16 %v2741, %v2737
        %v2834 = vpack.c.b16 %v2742, %v2738
        %v2835 = vpack.c.b16 %v2743, %v2739
        %v2836 = vpack.c.b16 %v2748, %v2744
        %v2837 = vpack.c.b16 %v2749, %v2745
        %v2838 = vpack.c.b16 %v2750, %v2746
        %v2839 = vpack.c.b16 %v2751, %v2747
        %v2840 = vpack.c.b16 %v2756, %v2752
        %v2841 = vpack.c.b16 %v2757, %v2753
        %v2842 = vpack.c.b16 %v2758, %v2754
        %v2843 = vpack.c.b16 %v2759, %v2755
        %v2844 = vpack.c.b16 %v2764, %v2760
        %v2845 = vpack.c.b16 %v2765, %v2761
        %v2846 = vpack.c.b16 %v2766, %v2762
        %v2847 = vpack.c.b16 %v2767, %v2763
        %v2848 = vpack.c.b16 %v2772, %v2768
        %v2849 = vpack.c.b16 %v2773, %v2769
        %v2850 = vpack.c.b16 %v2774, %v2770
        %v2851 = vpack.c.b16 %v2775, %v2771
        %v2852 = vpack.c.b16 %v2780, %v2776
        %v2853 = vpack.c.b16 %v2781, %v2777
        %v2854 = vpack.c.b16 %v2782, %v2778
        %v2855 = vpack.c.b16 %v2783, %v2779
        %v2856 = vpack.c.b16 %v2788, %v2784
        %v2857 = vpack.c.b16 %v2789, %v2785
        %v2858 = vpack.c.b16 %v2790, %v2786
        %v2859 = vpack.c.b16 %v2791, %v2787
        %v2860 = vpack.c.b16 %v2796, %v2792
        %v2861 = vpack.c.b16 %v2797, %v2793
        %v2862 = vpack.c.b16 %v2798, %v2794
        %v2863 = vpack.c.b16 %v2799, %v2795
        %2928 = vmatprep.subr.bf16.mxu0 %v2829
        %2929 = vmatpush1.bf16.msra.mxu0 %v2828
        %2930 = vmatprep.subr.bf16.mxu0 %v2825
        %2931 = vmatpush1.bf16.msra.mxu0 %v2824
        %2932 = vmatprep.subr.bf16.mxu0 %v2821
        %2933 = vmatpush1.bf16.msra.mxu0 %v2820
        %2934 = vmatprep.subr.bf16.mxu0 %v2817
        %2935 = vmatpush1.bf16.msra.mxu0 %v2816
        %2936 = vmatprep.subr.bf16.mxu0 %v2813
        %2937 = vmatpush1.bf16.msra.mxu0 %v2812
        %2938 = vmatprep.subr.bf16.mxu0 %v2809
        %2939 = vmatpush1.bf16.msra.mxu0 %v2808
        %2940 = vmatprep.subr.bf16.mxu0 %v2805
        %2941 = vmatpush1.bf16.msra.mxu0 %v2804
        %2942 = vmatprep.subr.bf16.mxu0 %v2801
        %2943 = vmatpush1.bf16.msra.mxu0 %v2800
        %2944 = vmatprep.subr.bf16.mxu0 %v2861
        %2945 = vmatpush2.bf16.msra.mxu0 %v2860
        %2946 = vmatprep.subr.bf16.mxu0 %v2857
        %2947 = vmatpush2.bf16.msra.mxu0 %v2856
        %2948 = vmatprep.subr.bf16.mxu0 %v2853
        %2949 = vmatpush2.bf16.msra.mxu0 %v2852
        %2950 = vmatprep.subr.bf16.mxu0 %v2849
        %2951 = vmatpush2.bf16.msra.mxu0 %v2848
        %2952 = vmatprep.subr.bf16.mxu0 %v2845
        %2953 = vmatpush2.bf16.msra.mxu0 %v2844
        %2954 = vmatprep.subr.bf16.mxu0 %v2841
        %2955 = vmatpush2.bf16.msra.mxu0 %v2840
        %2956 = vmatprep.subr.bf16.mxu0 %v2837
        %2957 = vmatpush2.bf16.msra.mxu0 %v2836
        %2958 = vmatprep.subr.bf16.mxu0 %v2833
        %2959 = vmatpush2.bf16.msra.mxu0 %v2832
        %2960 = vmatprep.mubr.bf16.mxu0 %v2538
        %2961 = vmatmul.mubr.bf16.gmra.mxu0 %v2537
        %v2962 = vpop.f32.mrf.mxu0
        %v2963 = vadd.f32 0.0, %v2962
        %v2964 = vpop.f32.mrf.mxu0
        %v2965 = vadd.f32 0.0, %v2964
        %v2966 = vpop.f32.mrf.mxu0
        %v2967 = vadd.f32 0.0, %v2966
        %v2968 = vpop.f32.mrf.mxu0
        %v2969 = vadd.f32 0.0, %v2968
        %2970 = vmatprep.mubr.bf16.mxu0 %v2540
        %2971 = vmatmul.mubr.bf16.gmra.mxu0 %v2539
        %v2972 = vpop.f32.mrf.mxu0
        %v2973 = vadd.f32 0.0, %v2972
        %v2974 = vpop.f32.mrf.mxu0
        %v2975 = vadd.f32 0.0, %v2974
        %v2976 = vpop.f32.mrf.mxu0
        %v2977 = vadd.f32 0.0, %v2976
        %v2978 = vpop.f32.mrf.mxu0
        %v2979 = vadd.f32 0.0, %v2978
        %2980 = vdwg.mxu0
        %2981 = vmatprep.subr.bf16.mxu0 %v2831
        %2982 = vmatpush1.bf16.msra.mxu0 %v2830
        %2983 = vmatprep.subr.bf16.mxu0 %v2827
        %2984 = vmatpush1.bf16.msra.mxu0 %v2826
        %2985 = vmatprep.subr.bf16.mxu0 %v2823
        %2986 = vmatpush1.bf16.msra.mxu0 %v2822
        %2987 = vmatprep.subr.bf16.mxu0 %v2819
        %2988 = vmatpush1.bf16.msra.mxu0 %v2818
        %2989 = vmatprep.subr.bf16.mxu0 %v2815
        %2990 = vmatpush1.bf16.msra.mxu0 %v2814
        %2991 = vmatprep.subr.bf16.mxu0 %v2811
        %2992 = vmatpush1.bf16.msra.mxu0 %v2810
        %2993 = vmatprep.subr.bf16.mxu0 %v2807
        %2994 = vmatpush1.bf16.msra.mxu0 %v2806
        %2995 = vmatprep.subr.bf16.mxu0 %v2803
        %2996 = vmatpush1.bf16.msra.mxu0 %v2802
        %2997 = vmatprep.subr.bf16.mxu0 %v2863
        %2998 = vmatpush2.bf16.msra.mxu0 %v2862
        %2999 = vmatprep.subr.bf16.mxu0 %v2859
        %3000 = vmatpush2.bf16.msra.mxu0 %v2858
        %3001 = vmatprep.subr.bf16.mxu0 %v2855
        %3002 = vmatpush2.bf16.msra.mxu0 %v2854
        %3003 = vmatprep.subr.bf16.mxu0 %v2851
        %3004 = vmatpush2.bf16.msra.mxu0 %v2850
        %3005 = vmatprep.subr.bf16.mxu0 %v2847
        %3006 = vmatpush2.bf16.msra.mxu0 %v2846
        %3007 = vmatprep.subr.bf16.mxu0 %v2843
        %3008 = vmatpush2.bf16.msra.mxu0 %v2842
        %3009 = vmatprep.subr.bf16.mxu0 %v2839
        %3010 = vmatpush2.bf16.msra.mxu0 %v2838
        %3011 = vmatprep.subr.bf16.mxu0 %v2835
        %3012 = vmatpush2.bf16.msra.mxu0 %v2834
        %3013 = vmatprep.mubr.bf16.mxu0 %v2538
        %3014 = vmatmul.mubr.bf16.gmra.mxu0 %v2537
        %v3015 = vpop.f32.mrf.mxu0
        %v3016 = vadd.f32 0.0, %v3015
        %v3017 = vpop.f32.mrf.mxu0
        %v3018 = vadd.f32 0.0, %v3017
        %v3019 = vpop.f32.mrf.mxu0
        %v3020 = vadd.f32 0.0, %v3019
        %v3021 = vpop.f32.mrf.mxu0
        %v3022 = vadd.f32 0.0, %v3021
        %3023 = vmatprep.mubr.bf16.mxu0 %v2540
        %3024 = vmatmul.mubr.bf16.gmra.mxu0 %v2539
        %v3025 = vpop.f32.mrf.mxu0
        %v3026 = vadd.f32 0.0, %v3025
        %v3027 = vpop.f32.mrf.mxu0
        %v3028 = vadd.f32 0.0, %v3027
        %v3029 = vpop.f32.mrf.mxu0
        %v3030 = vadd.f32 0.0, %v3029
        %v3031 = vpop.f32.mrf.mxu0
        %v3032 = vadd.f32 0.0, %v3031
        %3033 = vdwg.mxu0
        %v3098 = vunpack.c.l.b16 %v1427
        %v3099 = vunpack.c.h.b16 %v1427
        %v3100 = vunpack.c.l.b16 %v1428
        %v3101 = vunpack.c.h.b16 %v1428
        %v3102 = vunpack.c.l.b16 %v1429
        %v3103 = vunpack.c.h.b16 %v1429
        %v3104 = vunpack.c.l.b16 %v1430
        %v3105 = vunpack.c.h.b16 %v1430
        %v3106 = vunpack.c.l.b16 %v1431
        %v3107 = vunpack.c.h.b16 %v1431
        %v3108 = vunpack.c.l.b16 %v1432
        %v3109 = vunpack.c.h.b16 %v1432
        %v3110 = vunpack.c.l.b16 %v1433
        %v3111 = vunpack.c.h.b16 %v1433
        %v3112 = vunpack.c.l.b16 %v1434
        %v3113 = vunpack.c.h.b16 %v1434
        %v3114 = vunpack.c.l.b16 %v1435
        %v3115 = vunpack.c.h.b16 %v1435
        %v3116 = vunpack.c.l.b16 %v1436
        %v3117 = vunpack.c.h.b16 %v1436
        %v3118 = vunpack.c.l.b16 %v1437
        %v3119 = vunpack.c.h.b16 %v1437
        %v3120 = vunpack.c.l.b16 %v1438
        %v3121 = vunpack.c.h.b16 %v1438
        %v3122 = vunpack.c.l.b16 %v1439
        %v3123 = vunpack.c.h.b16 %v1439
        %v3124 = vunpack.c.l.b16 %v1440
        %v3125 = vunpack.c.h.b16 %v1440
        %v3126 = vunpack.c.l.b16 %v1441
        %v3127 = vunpack.c.h.b16 %v1441
        %v3128 = vunpack.c.l.b16 %v1442
        %v3129 = vunpack.c.h.b16 %v1442
        %v3130 = vunpack.c.l.b16 %v1443
        %v3131 = vunpack.c.h.b16 %v1443
        %v3132 = vunpack.c.l.b16 %v1444
        %v3133 = vunpack.c.h.b16 %v1444
        %v3134 = vunpack.c.l.b16 %v1445
        %v3135 = vunpack.c.h.b16 %v1445
        %v3136 = vunpack.c.l.b16 %v1446
        %v3137 = vunpack.c.h.b16 %v1446
        %v3138 = vunpack.c.l.b16 %v1447
        %v3139 = vunpack.c.h.b16 %v1447
        %v3140 = vunpack.c.l.b16 %v1448
        %v3141 = vunpack.c.h.b16 %v1448
        %v3142 = vunpack.c.l.b16 %v1449
        %v3143 = vunpack.c.h.b16 %v1449
        %v3144 = vunpack.c.l.b16 %v1450
        %v3145 = vunpack.c.h.b16 %v1450
        %v3146 = vunpack.c.l.b16 %v1451
        %v3147 = vunpack.c.h.b16 %v1451
        %v3148 = vunpack.c.l.b16 %v1452
        %v3149 = vunpack.c.h.b16 %v1452
        %v3150 = vunpack.c.l.b16 %v1453
        %v3151 = vunpack.c.h.b16 %v1453
        %v3152 = vunpack.c.l.b16 %v1454
        %v3153 = vunpack.c.h.b16 %v1454
        %v3154 = vunpack.c.l.b16 %v1455
        %v3155 = vunpack.c.h.b16 %v1455
        %v3156 = vunpack.c.l.b16 %v1456
        %v3157 = vunpack.c.h.b16 %v1456
        %v3158 = vunpack.c.l.b16 %v1457
        %v3159 = vunpack.c.h.b16 %v1457
        %v3160 = vunpack.c.l.b16 %v1458
        %v3161 = vunpack.c.h.b16 %v1458
        %v3162 = vunpack.c.l.b16 %v1459
        %v3163 = vunpack.c.h.b16 %v1459
        %v3164 = vunpack.c.l.b16 %v1460
        %v3165 = vunpack.c.h.b16 %v1460
        %v3166 = vunpack.c.l.b16 %v1461
        %v3167 = vunpack.c.h.b16 %v1461
        %v3168 = vunpack.c.l.b16 %v1462
        %v3169 = vunpack.c.h.b16 %v1462
        %v3170 = vunpack.c.l.b16 %v1463
        %v3171 = vunpack.c.h.b16 %v1463
        %v3172 = vunpack.c.l.b16 %v1464
        %v3173 = vunpack.c.h.b16 %v1464
        %v3174 = vunpack.c.l.b16 %v1465
        %v3175 = vunpack.c.h.b16 %v1465
        %v3176 = vunpack.c.l.b16 %v1466
        %v3177 = vunpack.c.h.b16 %v1466
        %v3178 = vunpack.c.l.b16 %v1467
        %v3179 = vunpack.c.h.b16 %v1467
        %v3180 = vunpack.c.l.b16 %v1468
        %v3181 = vunpack.c.h.b16 %v1468
        %v3182 = vunpack.c.l.b16 %v1469
        %v3183 = vunpack.c.h.b16 %v1469
        %v3184 = vunpack.c.l.b16 %v1470
        %v3185 = vunpack.c.h.b16 %v1470
        %v3186 = vunpack.c.l.b16 %v1471
        %v3187 = vunpack.c.h.b16 %v1471
        %v3188 = vunpack.c.l.b16 %v1472
        %v3189 = vunpack.c.h.b16 %v1472
        %v3190 = vunpack.c.l.b16 %v1473
        %v3191 = vunpack.c.h.b16 %v1473
        %v3192 = vunpack.c.l.b16 %v1474
        %v3193 = vunpack.c.h.b16 %v1474
        %v3194 = vunpack.c.l.b16 %v1475
        %v3195 = vunpack.c.h.b16 %v1475
        %v3196 = vunpack.c.l.b16 %v1476
        %v3197 = vunpack.c.h.b16 %v1476
        %v3198 = vunpack.c.l.b16 %v1477
        %v3199 = vunpack.c.h.b16 %v1477
        %v3200 = vunpack.c.l.b16 %v1478
        %v3201 = vunpack.c.h.b16 %v1478
        %v3202 = vunpack.c.l.b16 %v1479
        %v3203 = vunpack.c.h.b16 %v1479
        %v3204 = vunpack.c.l.b16 %v1480
        %v3205 = vunpack.c.h.b16 %v1480
        %v3206 = vunpack.c.l.b16 %v1481
        %v3207 = vunpack.c.h.b16 %v1481
        %v3208 = vunpack.c.l.b16 %v1482
        %v3209 = vunpack.c.h.b16 %v1482
        %v3210 = vunpack.c.l.b16 %v1483
        %v3211 = vunpack.c.h.b16 %v1483
        %v3212 = vunpack.c.l.b16 %v1484
        %v3213 = vunpack.c.h.b16 %v1484
        %v3214 = vunpack.c.l.b16 %v1485
        %v3215 = vunpack.c.h.b16 %v1485
        %v3216 = vunpack.c.l.b16 %v1486
        %v3217 = vunpack.c.h.b16 %v1486
        %v3218 = vunpack.c.l.b16 %v1487
        %v3219 = vunpack.c.h.b16 %v1487
        %v3220 = vunpack.c.l.b16 %v1488
        %v3221 = vunpack.c.h.b16 %v1488
        %v3222 = vunpack.c.l.b16 %v1489
        %v3223 = vunpack.c.h.b16 %v1489
        %v3224 = vunpack.c.l.b16 %v1490
        %v3225 = vunpack.c.h.b16 %v1490
        %v3226 = vpack.c.b16 %v3102, %v3098
        %v3227 = vpack.c.b16 %v3103, %v3099
        %v3228 = vpack.c.b16 %v3104, %v3100
        %v3229 = vpack.c.b16 %v3105, %v3101
        %v3230 = vpack.c.b16 %v3110, %v3106
        %v3231 = vpack.c.b16 %v3111, %v3107
        %v3232 = vpack.c.b16 %v3112, %v3108
        %v3233 = vpack.c.b16 %v3113, %v3109
        %v3234 = vpack.c.b16 %v3118, %v3114
        %v3235 = vpack.c.b16 %v3119, %v3115
        %v3236 = vpack.c.b16 %v3120, %v3116
        %v3237 = vpack.c.b16 %v3121, %v3117
        %v3238 = vpack.c.b16 %v3126, %v3122
        %v3239 = vpack.c.b16 %v3127, %v3123
        %v3240 = vpack.c.b16 %v3128, %v3124
        %v3241 = vpack.c.b16 %v3129, %v3125
        %v3242 = vpack.c.b16 %v3134, %v3130
        %v3243 = vpack.c.b16 %v3135, %v3131
        %v3244 = vpack.c.b16 %v3136, %v3132
        %v3245 = vpack.c.b16 %v3137, %v3133
        %v3246 = vpack.c.b16 %v3142, %v3138
        %v3247 = vpack.c.b16 %v3143, %v3139
        %v3248 = vpack.c.b16 %v3144, %v3140
        %v3249 = vpack.c.b16 %v3145, %v3141
        %v3250 = vpack.c.b16 %v3150, %v3146
        %v3251 = vpack.c.b16 %v3151, %v3147
        %v3252 = vpack.c.b16 %v3152, %v3148
        %v3253 = vpack.c.b16 %v3153, %v3149
        %v3254 = vpack.c.b16 %v3158, %v3154
        %v3255 = vpack.c.b16 %v3159, %v3155
        %v3256 = vpack.c.b16 %v3160, %v3156
        %v3257 = vpack.c.b16 %v3161, %v3157
        %v3258 = vpack.c.b16 %v3166, %v3162
        %v3259 = vpack.c.b16 %v3167, %v3163
        %v3260 = vpack.c.b16 %v3168, %v3164
        %v3261 = vpack.c.b16 %v3169, %v3165
        %v3262 = vpack.c.b16 %v3174, %v3170
        %v3263 = vpack.c.b16 %v3175, %v3171
        %v3264 = vpack.c.b16 %v3176, %v3172
        %v3265 = vpack.c.b16 %v3177, %v3173
        %v3266 = vpack.c.b16 %v3182, %v3178
        %v3267 = vpack.c.b16 %v3183, %v3179
        %v3268 = vpack.c.b16 %v3184, %v3180
        %v3269 = vpack.c.b16 %v3185, %v3181
        %v3270 = vpack.c.b16 %v3190, %v3186
        %v3271 = vpack.c.b16 %v3191, %v3187
        %v3272 = vpack.c.b16 %v3192, %v3188
        %v3273 = vpack.c.b16 %v3193, %v3189
        %v3274 = vpack.c.b16 %v3198, %v3194
        %v3275 = vpack.c.b16 %v3199, %v3195
        %v3276 = vpack.c.b16 %v3200, %v3196
        %v3277 = vpack.c.b16 %v3201, %v3197
        %v3278 = vpack.c.b16 %v3206, %v3202
        %v3279 = vpack.c.b16 %v3207, %v3203
        %v3280 = vpack.c.b16 %v3208, %v3204
        %v3281 = vpack.c.b16 %v3209, %v3205
        %v3282 = vpack.c.b16 %v3214, %v3210
        %v3283 = vpack.c.b16 %v3215, %v3211
        %v3284 = vpack.c.b16 %v3216, %v3212
        %v3285 = vpack.c.b16 %v3217, %v3213
        %v3286 = vpack.c.b16 %v3222, %v3218
        %v3287 = vpack.c.b16 %v3223, %v3219
        %v3288 = vpack.c.b16 %v3224, %v3220
        %v3289 = vpack.c.b16 %v3225, %v3221
        %3354 = vmatprep.subr.bf16.mxu0 %v3255
        %3355 = vmatpush1.bf16.msra.mxu0 %v3254
        %3356 = vmatprep.subr.bf16.mxu0 %v3251
        %3357 = vmatpush1.bf16.msra.mxu0 %v3250
        %3358 = vmatprep.subr.bf16.mxu0 %v3247
        %3359 = vmatpush1.bf16.msra.mxu0 %v3246
        %3360 = vmatprep.subr.bf16.mxu0 %v3243
        %3361 = vmatpush1.bf16.msra.mxu0 %v3242
        %3362 = vmatprep.subr.bf16.mxu0 %v3239
        %3363 = vmatpush1.bf16.msra.mxu0 %v3238
        %3364 = vmatprep.subr.bf16.mxu0 %v3235
        %3365 = vmatpush1.bf16.msra.mxu0 %v3234
        %3366 = vmatprep.subr.bf16.mxu0 %v3231
        %3367 = vmatpush1.bf16.msra.mxu0 %v3230
        %3368 = vmatprep.subr.bf16.mxu0 %v3227
        %3369 = vmatpush1.bf16.msra.mxu0 %v3226
        %3370 = vmatprep.subr.bf16.mxu0 %v3287
        %3371 = vmatpush2.bf16.msra.mxu0 %v3286
        %3372 = vmatprep.subr.bf16.mxu0 %v3283
        %3373 = vmatpush2.bf16.msra.mxu0 %v3282
        %3374 = vmatprep.subr.bf16.mxu0 %v3279
        %3375 = vmatpush2.bf16.msra.mxu0 %v3278
        %3376 = vmatprep.subr.bf16.mxu0 %v3275
        %3377 = vmatpush2.bf16.msra.mxu0 %v3274
        %3378 = vmatprep.subr.bf16.mxu0 %v3271
        %3379 = vmatpush2.bf16.msra.mxu0 %v3270
        %3380 = vmatprep.subr.bf16.mxu0 %v3267
        %3381 = vmatpush2.bf16.msra.mxu0 %v3266
        %3382 = vmatprep.subr.bf16.mxu0 %v3263
        %3383 = vmatpush2.bf16.msra.mxu0 %v3262
        %3384 = vmatprep.subr.bf16.mxu0 %v3259
        %3385 = vmatpush2.bf16.msra.mxu0 %v3258
        %3386 = vmatprep.mubr.bf16.mxu0 %v1421
        %3387 = vmatmul.mubr.bf16.gmra.mxu0 %v1420
        %v3388 = vpop.f32.mrf.mxu0
        %v3389 = vadd.f32 %v2963, %v3388
        %v3390 = vpop.f32.mrf.mxu0
        %v3391 = vadd.f32 %v2965, %v3390
        %v3392 = vpop.f32.mrf.mxu0
        %v3393 = vadd.f32 %v2967, %v3392
        %v3394 = vpop.f32.mrf.mxu0
        %v3395 = vadd.f32 %v2969, %v3394
        %3396 = vmatprep.mubr.bf16.mxu0 %v1423
        %3397 = vmatmul.mubr.bf16.gmra.mxu0 %v1422
        %v3398 = vpop.f32.mrf.mxu0
        %v3399 = vadd.f32 %v2973, %v3398
        %v3400 = vpop.f32.mrf.mxu0
        %v3401 = vadd.f32 %v2975, %v3400
        %v3402 = vpop.f32.mrf.mxu0
        %v3403 = vadd.f32 %v2977, %v3402
        %v3404 = vpop.f32.mrf.mxu0
        %v3405 = vadd.f32 %v2979, %v3404
        %3406 = vdwg.mxu0
        %3407 = vmatprep.subr.bf16.mxu0 %v3257
        %3408 = vmatpush1.bf16.msra.mxu0 %v3256
        %3409 = vmatprep.subr.bf16.mxu0 %v3253
        %3410 = vmatpush1.bf16.msra.mxu0 %v3252
        %3411 = vmatprep.subr.bf16.mxu0 %v3249
        %3412 = vmatpush1.bf16.msra.mxu0 %v3248
        %3413 = vmatprep.subr.bf16.mxu0 %v3245
        %3414 = vmatpush1.bf16.msra.mxu0 %v3244
        %3415 = vmatprep.subr.bf16.mxu0 %v3241
        %3416 = vmatpush1.bf16.msra.mxu0 %v3240
        %3417 = vmatprep.subr.bf16.mxu0 %v3237
        %3418 = vmatpush1.bf16.msra.mxu0 %v3236
        %3419 = vmatprep.subr.bf16.mxu0 %v3233
        %3420 = vmatpush1.bf16.msra.mxu0 %v3232
        %3421 = vmatprep.subr.bf16.mxu0 %v3229
        %3422 = vmatpush1.bf16.msra.mxu0 %v3228
        %3423 = vmatprep.subr.bf16.mxu0 %v3289
        %3424 = vmatpush2.bf16.msra.mxu0 %v3288
        %3425 = vmatprep.subr.bf16.mxu0 %v3285
        %3426 = vmatpush2.bf16.msra.mxu0 %v3284
        %3427 = vmatprep.subr.bf16.mxu0 %v3281
        %3428 = vmatpush2.bf16.msra.mxu0 %v3280
        %3429 = vmatprep.subr.bf16.mxu0 %v3277
        %3430 = vmatpush2.bf16.msra.mxu0 %v3276
        %3431 = vmatprep.subr.bf16.mxu0 %v3273
        %3432 = vmatpush2.bf16.msra.mxu0 %v3272
        %3433 = vmatprep.subr.bf16.mxu0 %v3269
        %3434 = vmatpush2.bf16.msra.mxu0 %v3268
        %3435 = vmatprep.subr.bf16.mxu0 %v3265
        %3436 = vmatpush2.bf16.msra.mxu0 %v3264
        %3437 = vmatprep.subr.bf16.mxu0 %v3261
        %3438 = vmatpush2.bf16.msra.mxu0 %v3260
        %3439 = vmatprep.mubr.bf16.mxu0 %v1421
        %3440 = vmatmul.mubr.bf16.gmra.mxu0 %v1420
        %v3441 = vpop.f32.mrf.mxu0
        %v3442 = vadd.f32 %v3016, %v3441
        %v3443 = vpop.f32.mrf.mxu0
        %v3444 = vadd.f32 %v3018, %v3443
        %v3445 = vpop.f32.mrf.mxu0
        %v3446 = vadd.f32 %v3020, %v3445
        %v3447 = vpop.f32.mrf.mxu0
        %v3448 = vadd.f32 %v3022, %v3447
        %3449 = vmatprep.mubr.bf16.mxu0 %v1423
        %3450 = vmatmul.mubr.bf16.gmra.mxu0 %v1422
        %v3451 = vpop.f32.mrf.mxu0
        %v3452 = vadd.f32 %v3026, %v3451
        %v3453 = vpop.f32.mrf.mxu0
        %v3454 = vadd.f32 %v3028, %v3453
        %v3455 = vpop.f32.mrf.mxu0
        %v3456 = vadd.f32 %v3030, %v3455
        %v3457 = vpop.f32.mrf.mxu0
        %v3458 = vadd.f32 %v3032, %v3457
        %3459 = vdwg.mxu0
        %p3460 = scmp.eq.s32.totalorder %s28, 0
        // Predicated region
        $region53: #{tpu_custom_call.1} parent=35 // pred_check
          %p3461 = pneg %p3460
        $region54: #{tpu_custom_call.1} parent=35 // pred_check_branch
          %3463 = sbr.rel (%p3461) target = $region56
        $region55: #{tpu_custom_call.1} parent=35 // pred_region
          %3464 = vst [vmem:[#allocation10] sm:$0xff] %v3389
          %3465 = vst [vmem:[#allocation10 + $0x8] sm:$0xff] %v3391
          %3466 = vst [vmem:[#allocation10 + $0x10] sm:$0xff] %v3442
          %3467 = vst [vmem:[#allocation10 + $0x18] sm:$0xff] %v3444
          %3468 = vst [vmem:[#allocation10 + $0x20] sm:$0xff] %v3393
          %3469 = vst [vmem:[#allocation10 + $0x28] sm:$0xff] %v3395
          %3470 = vst [vmem:[#allocation10 + $0x30] sm:$0xff] %v3446
          %3471 = vst [vmem:[#allocation10 + $0x38] sm:$0xff] %v3448
          %3472 = vst [vmem:[#allocation10 + $0x40] sm:$0xff] %v3399
          %3473 = vst [vmem:[#allocation10 + $0x48] sm:$0xff] %v3401
          %3474 = vst [vmem:[#allocation10 + $0x50] sm:$0xff] %v3452
          %3475 = vst [vmem:[#allocation10 + $0x58] sm:$0xff] %v3454
          %3476 = vst [vmem:[#allocation10 + $0x60] sm:$0xff] %v3403
          %3477 = vst [vmem:[#allocation10 + $0x68] sm:$0xff] %v3405
          %3478 = vst [vmem:[#allocation10 + $0x70] sm:$0xff] %v3456
          %3479 = vst [vmem:[#allocation10 + $0x78] sm:$0xff] %v3458
        $region56: #{tpu_custom_call.1} parent=35 // pred_fallthru
          _
        %p3480 = scmp.gt.s32.totalorder %s28, 0
        // Predicated region
        $region57: #{tpu_custom_call.1} parent=35 // pred_check
          %p3481 = pneg %p3480
        $region58: #{tpu_custom_call.1} parent=35 // pred_check_branch
          %3483 = sbr.rel (%p3481) target = $region60
        $region59: #{tpu_custom_call.1} parent=35 // pred_region
          %v3484 = vld [vmem:[#allocation10] sm:$0xff]
          %v3485 = vld [vmem:[#allocation10 + $0x8] sm:$0xff]
          %v3486 = vld [vmem:[#allocation10 + $0x10] sm:$0xff]
          %v3487 = vld [vmem:[#allocation10 + $0x18] sm:$0xff]
          %v3488 = vld [vmem:[#allocation10 + $0x20] sm:$0xff]
          %v3489 = vld [vmem:[#allocation10 + $0x28] sm:$0xff]
          %v3490 = vld [vmem:[#allocation10 + $0x30] sm:$0xff]
          %v3491 = vld [vmem:[#allocation10 + $0x38] sm:$0xff]
          %v3492 = vld [vmem:[#allocation10 + $0x40] sm:$0xff]
          %v3493 = vld [vmem:[#allocation10 + $0x48] sm:$0xff]
          %v3494 = vld [vmem:[#allocation10 + $0x50] sm:$0xff]
          %v3495 = vld [vmem:[#allocation10 + $0x58] sm:$0xff]
          %v3496 = vld [vmem:[#allocation10 + $0x60] sm:$0xff]
          %v3497 = vld [vmem:[#allocation10 + $0x68] sm:$0xff]
          %v3498 = vld [vmem:[#allocation10 + $0x70] sm:$0xff]
          %v3499 = vld [vmem:[#allocation10 + $0x78] sm:$0xff]
          %v3500 = vadd.f32 %v3484, %v3389
          %v3501 = vadd.f32 %v3485, %v3391
          %v3502 = vadd.f32 %v3486, %v3442
          %v3503 = vadd.f32 %v3487, %v3444
          %v3504 = vadd.f32 %v3488, %v3393
          %v3505 = vadd.f32 %v3489, %v3395
          %v3506 = vadd.f32 %v3490, %v3446
          %v3507 = vadd.f32 %v3491, %v3448
          %v3508 = vadd.f32 %v3492, %v3399
          %v3509 = vadd.f32 %v3493, %v3401
          %v3510 = vadd.f32 %v3494, %v3452
          %v3511 = vadd.f32 %v3495, %v3454
          %v3512 = vadd.f32 %v3496, %v3403
          %v3513 = vadd.f32 %v3497, %v3405
          %v3514 = vadd.f32 %v3498, %v3456
          %v3515 = vadd.f32 %v3499, %v3458
          %3516 = vst [vmem:[#allocation10] sm:$0xff] %v3500
          %3517 = vst [vmem:[#allocation10 + $0x8] sm:$0xff] %v3501
          %3518 = vst [vmem:[#allocation10 + $0x10] sm:$0xff] %v3502
          %3519 = vst [vmem:[#allocation10 + $0x18] sm:$0xff] %v3503
          %3520 = vst [vmem:[#allocation10 + $0x20] sm:$0xff] %v3504
          %3521 = vst [vmem:[#allocation10 + $0x28] sm:$0xff] %v3505
          %3522 = vst [vmem:[#allocation10 + $0x30] sm:$0xff] %v3506
          %3523 = vst [vmem:[#allocation10 + $0x38] sm:$0xff] %v3507
          %3524 = vst [vmem:[#allocation10 + $0x40] sm:$0xff] %v3508
          %3525 = vst [vmem:[#allocation10 + $0x48] sm:$0xff] %v3509
          %3526 = vst [vmem:[#allocation10 + $0x50] sm:$0xff] %v3510
          %3527 = vst [vmem:[#allocation10 + $0x58] sm:$0xff] %v3511
          %3528 = vst [vmem:[#allocation10 + $0x60] sm:$0xff] %v3512
          %3529 = vst [vmem:[#allocation10 + $0x68] sm:$0xff] %v3513
          %3530 = vst [vmem:[#allocation10 + $0x70] sm:$0xff] %v3514
          %3531 = vst [vmem:[#allocation10 + $0x78] sm:$0xff] %v3515
        $region60: #{tpu_custom_call.1} parent=35 // pred_fallthru
          _
        // Predicated region
        $region61: #{tpu_custom_call.1} parent=35 // pred_check
          %p3532 = pneg %p157
        $region62: #{tpu_custom_call.1} parent=35 // pred_check_branch
          %3534 = sbr.rel (%p3532) target = $region64
        $region63: #{tpu_custom_call.1} parent=35 // pred_region
          %s3535 = smul.u32 4, %s27
          %s3537 = ssub.s32 2048, 2048
          %3538 = vsyncadd [#allocation4], %s3537
          %s3539 = smul.addr %s3535, 4
          %s3540 = smul.addr %s3539, 128
          %s3541 = scalar_lea.hbm %s4, %s3540
          %s3542 = sshll.u32 [#allocation10], 4
          %s3543 = int_to_ptr.vmem [resolvable:$true] %s3542
          %3548 = dma.vmem_to_hbm [thread:$0]  %s3543, 2048, %s3541, [#allocation4], 512, 512, 32
        $region64: #{tpu_custom_call.1} parent=35 // pred_fallthru
          _
        // Predicated region
        $region65: #{tpu_custom_call.1} parent=35 // pred_check
          %p3549 = pneg %p157
        $region66: #{tpu_custom_call.1} parent=35 // pred_check_branch
          %3551 = sbr.rel (%p3549) target = $region68
        $region67: #{tpu_custom_call.1} parent=35 // pred_region
          %3552 = dma.done [#allocation4], 2048
        $region68: #{tpu_custom_call.1} parent=35 // pred_fallthru
          _
      $region36: #{tpu_custom_call.1} parent=5 // pred_fallthru
        _
      %p3553 = scmp.le.s32.totalorder 2, %s18
      // Predicated region
      $region69: #{tpu_custom_call.1} parent=5 // pred_check
        %p3554 = pneg %p3553
      $region70: #{tpu_custom_call.1} parent=5 // pred_check_branch
        %3556 = sbr.rel (%p3554) target = $region72
      $region71: #{tpu_custom_call.1} parent=5 // pred_region
        %s3557 = ssub.s32 %s18, 2
      $region72: #{tpu_custom_call.1} parent=5 // pred_fallthru
        _
    $region6: #{tpu_custom_call.1} parent=1 // loop_footer
      %s22 = sadd.s32 1, %s18
    $region7: #{tpu_custom_call.1} parent=1 // loop_footer_branch
      %17 = sbr.rel target = $region3
    $region8: #{tpu_custom_call.1} parent=1 // loop_exit
      _
    %3558 = vsyncpa [#allocation3], 1
    %s3559 = scalar_lea.sflag [#allocation3], 1
    %3560 = vsyncpa %s3559, 1
    %3561 = vsyncpa [#allocation6], 1
    %s3562 = scalar_lea.sflag [#allocation6], 1
    %3563 = vsyncpa %s3562, 1
    %3564 = vsyncpa [#allocation9], 1
    %s3565 = scalar_lea.sflag [#allocation9], 1
    %3566 = vsyncpa %s3565, 1
    %3567 = vsyncpa [#allocation4], 1
    %s3568 = scalar_lea.sflag [#allocation4], 1
    %3569 = vsyncpa %s3568, 1

</llo_original>
